<compile_context>
chip_gen: v7x
topology: tpu7x:2x2x1
jax: 0.10.0
libtpu: 0.0.40
codegen_flags: <defaults>
</compile_context>

<pallas_src>
import jax
import jax.numpy as jnp
from jax.experimental import pallas as pl
from jax.experimental.pallas import tpu as pltpu

LATENT_DIM = 32
CHANNELS = 1
IMG_SIZE = 16
IMG_SHAPE = (CHANNELS, IMG_SIZE, IMG_SIZE)
IMG_DIM = CHANNELS * IMG_SIZE * IMG_SIZE        # 256
BN_EPS = 0.8                                    # nn.BatchNorm1d(out_feat, 0.8)
LEAKY_SLOPE = 0.2
HIDDEN = (128, 256, 512, 1024)
DIMS = (LATENT_DIM,) + HIDDEN + (IMG_DIM,)

# ---------------------------------------------------------------------------
# Packed layout for the small per-feature parameters.
# b2/b3/b4 are omitted: BN's batch-mean subtraction cancels them exactly.
# Every feature width is a multiple of 128, so every static slice below is
# 128-lane aligned.
# ---------------------------------------------------------------------------
_PACK_NAMES = []
_PACK_SIZES = []
for _li, _fout in enumerate(DIMS[1:]):
    if _li == 0 or _li == 4:                   # only non-BN layers keep bias
        _PACK_NAMES.append(f"b{_li + 1}"); _PACK_SIZES.append(_fout)
    if 1 <= _li <= 3:                          # BN on hidden blocks 2..4
        _PACK_NAMES.append(f"g{_li + 1}"); _PACK_SIZES.append(_fout)
        _PACK_NAMES.append(f"be{_li + 1}"); _PACK_SIZES.append(_fout)

_PACK_OFFSETS = {}
_off = 0
for _n, _s in zip(_PACK_NAMES, _PACK_SIZES):
    _PACK_OFFSETS[_n] = (_off, _s)
    _off += _s
PACK_TOTAL = _off                               # 3968

_FLOPS_PER_ROW = 2 * sum(fi * fo for fi, fo in zip(DIMS[:-1], DIMS[1:]))
_WEIGHT_BYTES = 2 * sum(fi * fo for fi, fo in zip(DIMS[:-1], DIMS[1:]))  # bf16


def _leaky_relu(x, slope=LEAKY_SLOPE):
    return jnp.where(x > 0, x, slope * x)


def _bn_leaky(y, gamma, beta, eps):
    # Training-mode BatchNorm1d fused into a single scale/shift, then LeakyReLU.
    mean = jnp.mean(y, axis=0, keepdims=True)
    var = jnp.mean((y - mean) ** 2, axis=0, keepdims=True)
    scale = gamma * jax.lax.rsqrt(var + eps)
    shift = beta - mean * scale
    return _leaky_relu(y * scale + shift)


def generator_kernel(z_ref, w1_ref, p_ref,
                     w2_hbm, w3_hbm, w4_hbm, w5_hbm,
                     out_ref,
                     w2_v, w3_v, w4_v, w5_v, sem):
    # Kick off all big-weight DMAs up front; compute overlaps them.
    copies = (
        pltpu.make_async_copy(w2_hbm, w2_v, sem.at[0]),
        pltpu.make_async_copy(w3_hbm, w3_v, sem.at[1]),
        pltpu.make_async_copy(w4_hbm, w4_v, sem.at[2]),
        pltpu.make_async_copy(w5_hbm, w5_v, sem.at[3]),
    )
    for cp in copies:
        cp.start()

    def param(name):
        off, size = _PACK_OFFSETS[name]
        return p_ref[:, off:off + size]          # static, 128-aligned slice

    def matmul(x_f32, w_bf16):
        # bf16 x bf16 into the MXU, f32 accumulation.
        return jnp.dot(x_f32.astype(jnp.bfloat16), w_bf16,
                       preferred_element_type=jnp.float32)

    # block 1: Linear(latent, 128) + LeakyReLU (normalize=False); w1 is the
    # tiny auto-DMA'd input, so this runs while w2..w5 are still in flight.
    h = _leaky_relu(matmul(z_ref[...], w1_ref[...]) + param("b1"))

    # block 2: Linear(128, 256) + BatchNorm1d + LeakyReLU
    copies[0].wait()
    h = _bn_leaky(matmul(h, w2_v[...]), param("g2"), param("be2"), BN_EPS)

    # block 3: Linear(256, 512) + BatchNorm1d + LeakyReLU
    copies[1].wait()
    h = _bn_leaky(matmul(h, w3_v[...]), param("g3"), param("be3"), BN_EPS)

    # block 4: Linear(512, 1024) + BatchNorm1d + LeakyReLU
    copies[2].wait()
    h = _bn_leaky(matmul(h, w4_v[...]), param("g4"), param("be4"), BN_EPS)

    # head: Linear(1024, C*H*W) + Tanh
    copies[3].wait()
    out_ref[...] = jnp.tanh(matmul(h, w5_v[...]) + param("b5"))


def init_params(key):
    """PyTorch-style init: U(-1/sqrt(fan_in), 1/sqrt(fan_in)).

    Weights are stored transposed, (in_feat, out_feat), in bfloat16.
    b1, BN gamma/beta, b5 are packed into one (1, PACK_TOTAL) f32 buffer.
    Biases feeding a BN layer are cancelled by the batch-mean subtraction
    and are therefore not kept.
    """
    weights = []
    small = {}
    for li, (fin, fout) in enumerate(zip(DIMS[:-1], DIMS[1:])):
        key, kw, kb = jax.random.split(key, 3)
        bound = 1.0 / jnp.sqrt(jnp.float32(fin))
        w = jax.random.uniform(kw, (fin, fout), jnp.float32, -bound, bound)
        b = jax.random.uniform(kb, (fout,), jnp.float32, -bound, bound)
        weights.append(w.astype(jnp.bfloat16))
        if li == 0 or li == 4:
            small[f"b{li + 1}"] = b              # non-BN layers keep bias
        if 1 <= li <= 3:
            small[f"g{li + 1}"] = jnp.ones((fout,), jnp.float32)    # gamma
            small[f"be{li + 1}"] = jnp.zeros((fout,), jnp.float32)  # beta
    packed = jnp.concatenate([small[n] for n in _PACK_NAMES]).reshape(
        1, PACK_TOTAL)
    return tuple(weights), packed


def generator_forward(z, weights, packed):
    B = z.shape[0]
    w1, w2, w3, w4, w5 = weights
    vmem = pl.BlockSpec(memory_space=pltpu.MemorySpace.VMEM)
    hbm = pl.BlockSpec(memory_space=pl.ANY)
    cost = pl.CostEstimate(
        flops=B * _FLOPS_PER_ROW,
        transcendentals=B * IMG_DIM,
        bytes_accessed=_WEIGHT_BYTES + PACK_TOTAL * 4
        + B * (LATENT_DIM + IMG_DIM) * 4,
    )
    flat_img = pl.pallas_call(
        generator_kernel,
        out_shape=jax.ShapeDtypeStruct((B, IMG_DIM), jnp.float32),
        in_specs=[vmem, vmem, vmem, hbm, hbm, hbm, hbm],
        out_specs=vmem,
        scratch_shapes=[
            pltpu.VMEM(w2.shape, jnp.bfloat16),
            pltpu.VMEM(w3.shape, jnp.bfloat16),
            pltpu.VMEM(w4.shape, jnp.bfloat16),
            pltpu.VMEM(w5.shape, jnp.bfloat16),
            pltpu.SemaphoreType.DMA((4,)),
        ],
        compiler_params=pltpu.CompilerParams(vmem_limit_bytes=32 << 20),
        cost_estimate=cost,
    )(z, w1, packed, w2, w3, w4, w5)
    # img = img.view(img.size(0), *img_shape)  -> NCHW
    return flat_img.reshape(B, *IMG_SHAPE)


def generator_reference(z, weights, packed):
    """Pure-JAX reference mirroring the kernel math (bf16 dots, f32 acc)."""
    def param(name):
        off, size = _PACK_OFFSETS[name]
        return packed[:, off:off + size]

    def matmul(x, w):
        return jnp.dot(x.astype(jnp.bfloat16), w,
                       preferred_element_type=jnp.float32)

    h = _leaky_relu(matmul(z, weights[0]) + param("b1"))
    h = _bn_leaky(matmul(h, weights[1]), param("g2"), param("be2"), BN_EPS)
    h = _bn_leaky(matmul(h, weights[2]), param("g3"), param("be3"), BN_EPS)
    h = _bn_leaky(matmul(h, weights[3]), param("g4"), param("be4"), BN_EPS)
    out = jnp.tanh(matmul(h, weights[4]) + param("b5"))
    return out.reshape(z.shape[0], *IMG_SHAPE)


if __name__ == "__main__":
    key = jax.random.PRNGKey(0)
    k_param, k_z = jax.random.split(key)

    weights, packed = init_params(k_param)
    B = 8   # kernel supports much larger B (better weight-DMA amortization)
    z = jax.random.normal(k_z, (B, LATENT_DIM), dtype=jnp.float32)

    img = generator_forward(z, weights, packed)
    jax.block_until_ready(img)

    assert img.shape == (B,) + IMG_SHAPE, img.shape
    assert img.dtype == jnp.float32
    assert bool(jnp.all(jnp.isfinite(img)))
    assert bool(jnp.all(jnp.abs(img) <= 1.0))   # tanh output range

    ref = generator_reference(z, weights, packed)
    jax.block_until_ready(ref)
    assert bool(jnp.allclose(img, ref, rtol=1e-2, atol=1e-2)), \
        float(jnp.max(jnp.abs(img - ref)))

    print("KERNEL_OK")
</pallas_src>

<mosaic_0001>
module attributes {stable_mosaic.version = 11 : i64} {
  func.func @generator_kernel(%arg0: memref<8x32xf32, #tpu.memory_space<vmem>>, %arg1: memref<32x128xbf16, #tpu.memory_space<vmem>>, %arg2: memref<1x3968xf32, #tpu.memory_space<vmem>>, %arg3: memref<128x256xbf16, #tpu.memory_space<any>>, %arg4: memref<256x512xbf16, #tpu.memory_space<any>>, %arg5: memref<512x1024xbf16, #tpu.memory_space<any>>, %arg6: memref<1024x256xbf16, #tpu.memory_space<any>>, %arg7: memref<8x256xf32, #tpu.memory_space<vmem>>, %arg8: memref<128x256xbf16, #tpu.memory_space<vmem>>, %arg9: memref<256x512xbf16, #tpu.memory_space<vmem>>, %arg10: memref<512x1024xbf16, #tpu.memory_space<vmem>>, %arg11: memref<1024x256xbf16, #tpu.memory_space<vmem>>, %arg12: memref<4x!tpu.dma_semaphore, #tpu.memory_space<semaphore_mem>>) attributes {dimension_semantics = [], scalar_prefetch = 0 : i64, scratch_operands = 5 : i64, tpu.core_type = #tpu.core_type<tc>} {
    %c0_i32 = arith.constant 0 : i32
    %0 = tpu.memref_slice %arg12[%c0_i32] : memref<4x!tpu.dma_semaphore, #tpu.memory_space<semaphore_mem>> -> memref<1x!tpu.dma_semaphore, #tpu.memory_space<semaphore_mem>>
    %1 = tpu.memref_squeeze %0 : memref<1x!tpu.dma_semaphore, #tpu.memory_space<semaphore_mem>> -> memref<!tpu.dma_semaphore, #tpu.memory_space<semaphore_mem>>
    tpu.enqueue_dma source(%arg3 : memref<128x256xbf16, #tpu.memory_space<any>>) target(%arg8 : memref<128x256xbf16, #tpu.memory_space<vmem>>) target_semaphore(%1 : memref<!tpu.dma_semaphore, #tpu.memory_space<semaphore_mem>>)
    %c1_i32 = arith.constant 1 : i32
    %2 = tpu.memref_slice %arg12[%c1_i32] : memref<4x!tpu.dma_semaphore, #tpu.memory_space<semaphore_mem>> -> memref<1x!tpu.dma_semaphore, #tpu.memory_space<semaphore_mem>>
    %3 = tpu.memref_squeeze %2 : memref<1x!tpu.dma_semaphore, #tpu.memory_space<semaphore_mem>> -> memref<!tpu.dma_semaphore, #tpu.memory_space<semaphore_mem>>
    tpu.enqueue_dma source(%arg4 : memref<256x512xbf16, #tpu.memory_space<any>>) target(%arg9 : memref<256x512xbf16, #tpu.memory_space<vmem>>) target_semaphore(%3 : memref<!tpu.dma_semaphore, #tpu.memory_space<semaphore_mem>>)
    %c2_i32 = arith.constant 2 : i32
    %4 = tpu.memref_slice %arg12[%c2_i32] : memref<4x!tpu.dma_semaphore, #tpu.memory_space<semaphore_mem>> -> memref<1x!tpu.dma_semaphore, #tpu.memory_space<semaphore_mem>>
    %5 = tpu.memref_squeeze %4 : memref<1x!tpu.dma_semaphore, #tpu.memory_space<semaphore_mem>> -> memref<!tpu.dma_semaphore, #tpu.memory_space<semaphore_mem>>
    tpu.enqueue_dma source(%arg5 : memref<512x1024xbf16, #tpu.memory_space<any>>) target(%arg10 : memref<512x1024xbf16, #tpu.memory_space<vmem>>) target_semaphore(%5 : memref<!tpu.dma_semaphore, #tpu.memory_space<semaphore_mem>>)
    %c3_i32 = arith.constant 3 : i32
    %6 = tpu.memref_slice %arg12[%c3_i32] : memref<4x!tpu.dma_semaphore, #tpu.memory_space<semaphore_mem>> -> memref<1x!tpu.dma_semaphore, #tpu.memory_space<semaphore_mem>>
    %7 = tpu.memref_squeeze %6 : memref<1x!tpu.dma_semaphore, #tpu.memory_space<semaphore_mem>> -> memref<!tpu.dma_semaphore, #tpu.memory_space<semaphore_mem>>
    tpu.enqueue_dma source(%arg6 : memref<1024x256xbf16, #tpu.memory_space<any>>) target(%arg11 : memref<1024x256xbf16, #tpu.memory_space<vmem>>) target_semaphore(%7 : memref<!tpu.dma_semaphore, #tpu.memory_space<semaphore_mem>>)
    %c0 = arith.constant 0 : index
    %c0_0 = arith.constant 0 : index
    %8 = vector.load %arg0[%c0, %c0_0] : memref<8x32xf32, #tpu.memory_space<vmem>>, vector<8x32xf32>
    %c0_1 = arith.constant 0 : index
    %c0_2 = arith.constant 0 : index
    %9 = vector.load %arg1[%c0_1, %c0_2] : memref<32x128xbf16, #tpu.memory_space<vmem>>, vector<32x128xbf16>
    %10 = arith.truncf %8 : vector<8x32xf32> to vector<8x32xbf16>
    %cst = arith.constant dense<0.000000e+00> : vector<8x128xf32>
    %11 = tpu.matmul %10, %9, %cst {dimension_numbers = #tpu.dot_dimension_numbers<[1], [0], [0], [1], [0, 0, 1, 1], [], []>} : vector<8x32xbf16>, vector<32x128xbf16>, vector<8x128xf32> -> vector<8x128xf32>
    %c0_3 = arith.constant 0 : index
    %c0_4 = arith.constant 0 : index
    %12 = vector.load %arg2[%c0_3, %c0_4] : memref<1x3968xf32, #tpu.memory_space<vmem>>, vector<1x128xf32>
    %13 = vector.broadcast %12 : vector<1x128xf32> to vector<8x128xf32>
    %14 = arith.addf %11, %13 : vector<8x128xf32>
    %cst_5 = arith.constant 0.000000e+00 : f32
    %15 = vector.broadcast %cst_5 : f32 to vector<8x128xf32>
    %16 = arith.cmpf ogt, %14, %15 : vector<8x128xf32>
    %cst_6 = arith.constant 2.000000e-01 : f32
    %17 = vector.broadcast %cst_6 : f32 to vector<8x128xf32>
    %18 = arith.mulf %17, %14 : vector<8x128xf32>
    %19 = arith.select %16, %14, %18 : vector<8x128xi1>, vector<8x128xf32>
    %c0_i32_7 = arith.constant 0 : i32
    %20 = tpu.memref_slice %arg12[%c0_i32_7] : memref<4x!tpu.dma_semaphore, #tpu.memory_space<semaphore_mem>> -> memref<1x!tpu.dma_semaphore, #tpu.memory_space<semaphore_mem>>
    %21 = tpu.memref_squeeze %20 : memref<1x!tpu.dma_semaphore, #tpu.memory_space<semaphore_mem>> -> memref<!tpu.dma_semaphore, #tpu.memory_space<semaphore_mem>>
    tpu.wait_dma2 semaphore(%21 : memref<!tpu.dma_semaphore, #tpu.memory_space<semaphore_mem>>) src(%arg3 : memref<128x256xbf16, #tpu.memory_space<any>>) dst(%arg8 : memref<128x256xbf16, #tpu.memory_space<vmem>>)
    %c0_8 = arith.constant 0 : index
    %c0_9 = arith.constant 0 : index
    %22 = vector.load %arg8[%c0_8, %c0_9] : memref<128x256xbf16, #tpu.memory_space<vmem>>, vector<128x256xbf16>
    %23 = arith.truncf %19 : vector<8x128xf32> to vector<8x128xbf16>
    %cst_10 = arith.constant dense<0.000000e+00> : vector<8x256xf32>
    %24 = tpu.matmul %23, %22, %cst_10 {dimension_numbers = #tpu.dot_dimension_numbers<[1], [0], [0], [1], [0, 0, 1, 1], [], []>} : vector<8x128xbf16>, vector<128x256xbf16>, vector<8x256xf32> -> vector<8x256xf32>
    %c0_11 = arith.constant 0 : index
    %c128 = arith.constant 128 : index
    %25 = vector.load %arg2[%c0_11, %c128] : memref<1x3968xf32, #tpu.memory_space<vmem>>, vector<1x256xf32>
    %c0_12 = arith.constant 0 : index
    %c384 = arith.constant 384 : index
    %26 = vector.load %arg2[%c0_12, %c384] : memref<1x3968xf32, #tpu.memory_space<vmem>>, vector<1x256xf32>
    %cst_13 = arith.constant dense<0.000000e+00> : vector<256xf32>
    %27 = vector.multi_reduction <add>, %24, %cst_13 [0] : vector<8x256xf32> to vector<256xf32>
    %28 = vector.shape_cast %27 : vector<256xf32> to vector<1x256xf32>
    %cst_14 = arith.constant 8.000000e+00 : f32
    %29 = vector.broadcast %cst_14 : f32 to vector<1x256xf32>
    %30 = arith.divf %28, %29 : vector<1x256xf32>
    %31 = vector.broadcast %30 : vector<1x256xf32> to vector<8x256xf32>
    %32 = arith.subf %24, %31 : vector<8x256xf32>
    %33 = arith.mulf %32, %32 : vector<8x256xf32>
    %cst_15 = arith.constant dense<0.000000e+00> : vector<256xf32>
    %34 = vector.multi_reduction <add>, %33, %cst_15 [0] : vector<8x256xf32> to vector<256xf32>
    %35 = vector.shape_cast %34 : vector<256xf32> to vector<1x256xf32>
    %cst_16 = arith.constant 8.000000e+00 : f32
    %36 = vector.broadcast %cst_16 : f32 to vector<1x256xf32>
    %37 = arith.divf %35, %36 : vector<1x256xf32>
    %cst_17 = arith.constant 8.000000e-01 : f32
    %38 = vector.broadcast %cst_17 : f32 to vector<1x256xf32>
    %39 = arith.addf %37, %38 : vector<1x256xf32>
    %40 = math.rsqrt %39 : vector<1x256xf32>
    %41 = arith.mulf %25, %40 : vector<1x256xf32>
    %42 = arith.mulf %30, %41 : vector<1x256xf32>
    %43 = arith.subf %26, %42 : vector<1x256xf32>
    %44 = vector.broadcast %41 : vector<1x256xf32> to vector<8x256xf32>
    %45 = arith.mulf %24, %44 : vector<8x256xf32>
    %46 = vector.broadcast %43 : vector<1x256xf32> to vector<8x256xf32>
    %47 = arith.addf %45, %46 : vector<8x256xf32>
    %cst_18 = arith.constant 0.000000e+00 : f32
    %48 = vector.broadcast %cst_18 : f32 to vector<8x256xf32>
    %49 = arith.cmpf ogt, %47, %48 : vector<8x256xf32>
    %cst_19 = arith.constant 2.000000e-01 : f32
    %50 = vector.broadcast %cst_19 : f32 to vector<8x256xf32>
    %51 = arith.mulf %50, %47 : vector<8x256xf32>
    %52 = arith.select %49, %47, %51 : vector<8x256xi1>, vector<8x256xf32>
    %c1_i32_20 = arith.constant 1 : i32
    %53 = tpu.memref_slice %arg12[%c1_i32_20] : memref<4x!tpu.dma_semaphore, #tpu.memory_space<semaphore_mem>> -> memref<1x!tpu.dma_semaphore, #tpu.memory_space<semaphore_mem>>
    %54 = tpu.memref_squeeze %53 : memref<1x!tpu.dma_semaphore, #tpu.memory_space<semaphore_mem>> -> memref<!tpu.dma_semaphore, #tpu.memory_space<semaphore_mem>>
    tpu.wait_dma2 semaphore(%54 : memref<!tpu.dma_semaphore, #tpu.memory_space<semaphore_mem>>) src(%arg4 : memref<256x512xbf16, #tpu.memory_space<any>>) dst(%arg9 : memref<256x512xbf16, #tpu.memory_space<vmem>>)
    %c0_21 = arith.constant 0 : index
    %c0_22 = arith.constant 0 : index
    %55 = vector.load %arg9[%c0_21, %c0_22] : memref<256x512xbf16, #tpu.memory_space<vmem>>, vector<256x512xbf16>
    %56 = arith.truncf %52 : vector<8x256xf32> to vector<8x256xbf16>
    %cst_23 = arith.constant dense<0.000000e+00> : vector<8x512xf32>
    %57 = tpu.matmul %56, %55, %cst_23 {dimension_numbers = #tpu.dot_dimension_numbers<[1], [0], [0], [1], [0, 0, 1, 1], [], []>} : vector<8x256xbf16>, vector<256x512xbf16>, vector<8x512xf32> -> vector<8x512xf32>
    %c0_24 = arith.constant 0 : index
    %c640 = arith.constant 640 : index
    %58 = vector.load %arg2[%c0_24, %c640] : memref<1x3968xf32, #tpu.memory_space<vmem>>, vector<1x512xf32>
    %c0_25 = arith.constant 0 : index
    %c1152 = arith.constant 1152 : index
    %59 = vector.load %arg2[%c0_25, %c1152] : memref<1x3968xf32, #tpu.memory_space<vmem>>, vector<1x512xf32>
    %cst_26 = arith.constant dense<0.000000e+00> : vector<512xf32>
    %60 = vector.multi_reduction <add>, %57, %cst_26 [0] : vector<8x512xf32> to vector<512xf32>
    %61 = vector.shape_cast %60 : vector<512xf32> to vector<1x512xf32>
    %cst_27 = arith.constant 8.000000e+00 : f32
    %62 = vector.broadcast %cst_27 : f32 to vector<1x512xf32>
    %63 = arith.divf %61, %62 : vector<1x512xf32>
    %64 = vector.broadcast %63 : vector<1x512xf32> to vector<8x512xf32>
    %65 = arith.subf %57, %64 : vector<8x512xf32>
    %66 = arith.mulf %65, %65 : vector<8x512xf32>
    %cst_28 = arith.constant dense<0.000000e+00> : vector<512xf32>
    %67 = vector.multi_reduction <add>, %66, %cst_28 [0] : vector<8x512xf32> to vector<512xf32>
    %68 = vector.shape_cast %67 : vector<512xf32> to vector<1x512xf32>
    %cst_29 = arith.constant 8.000000e+00 : f32
    %69 = vector.broadcast %cst_29 : f32 to vector<1x512xf32>
    %70 = arith.divf %68, %69 : vector<1x512xf32>
    %cst_30 = arith.constant 8.000000e-01 : f32
    %71 = vector.broadcast %cst_30 : f32 to vector<1x512xf32>
    %72 = arith.addf %70, %71 : vector<1x512xf32>
    %73 = math.rsqrt %72 : vector<1x512xf32>
    %74 = arith.mulf %58, %73 : vector<1x512xf32>
    %75 = arith.mulf %63, %74 : vector<1x512xf32>
    %76 = arith.subf %59, %75 : vector<1x512xf32>
    %77 = vector.broadcast %74 : vector<1x512xf32> to vector<8x512xf32>
    %78 = arith.mulf %57, %77 : vector<8x512xf32>
    %79 = vector.broadcast %76 : vector<1x512xf32> to vector<8x512xf32>
    %80 = arith.addf %78, %79 : vector<8x512xf32>
    %cst_31 = arith.constant 0.000000e+00 : f32
    %81 = vector.broadcast %cst_31 : f32 to vector<8x512xf32>
    %82 = arith.cmpf ogt, %80, %81 : vector<8x512xf32>
    %cst_32 = arith.constant 2.000000e-01 : f32
    %83 = vector.broadcast %cst_32 : f32 to vector<8x512xf32>
    %84 = arith.mulf %83, %80 : vector<8x512xf32>
    %85 = arith.select %82, %80, %84 : vector<8x512xi1>, vector<8x512xf32>
    %c2_i32_33 = arith.constant 2 : i32
    %86 = tpu.memref_slice %arg12[%c2_i32_33] : memref<4x!tpu.dma_semaphore, #tpu.memory_space<semaphore_mem>> -> memref<1x!tpu.dma_semaphore, #tpu.memory_space<semaphore_mem>>
    %87 = tpu.memref_squeeze %86 : memref<1x!tpu.dma_semaphore, #tpu.memory_space<semaphore_mem>> -> memref<!tpu.dma_semaphore, #tpu.memory_space<semaphore_mem>>
    tpu.wait_dma2 semaphore(%87 : memref<!tpu.dma_semaphore, #tpu.memory_space<semaphore_mem>>) src(%arg5 : memref<512x1024xbf16, #tpu.memory_space<any>>) dst(%arg10 : memref<512x1024xbf16, #tpu.memory_space<vmem>>)
    %c0_34 = arith.constant 0 : index
    %c0_35 = arith.constant 0 : index
    %88 = vector.load %arg10[%c0_34, %c0_35] : memref<512x1024xbf16, #tpu.memory_space<vmem>>, vector<512x1024xbf16>
    %89 = arith.truncf %85 : vector<8x512xf32> to vector<8x512xbf16>
    %cst_36 = arith.constant dense<0.000000e+00> : vector<8x1024xf32>
    %90 = tpu.matmul %89, %88, %cst_36 {dimension_numbers = #tpu.dot_dimension_numbers<[1], [0], [0], [1], [0, 0, 1, 1], [], []>} : vector<8x512xbf16>, vector<512x1024xbf16>, vector<8x1024xf32> -> vector<8x1024xf32>
    %c0_37 = arith.constant 0 : index
    %c1664 = arith.constant 1664 : index
    %91 = vector.load %arg2[%c0_37, %c1664] : memref<1x3968xf32, #tpu.memory_space<vmem>>, vector<1x1024xf32>
    %c0_38 = arith.constant 0 : index
    %c2688 = arith.constant 2688 : index
    %92 = vector.load %arg2[%c0_38, %c2688] : memref<1x3968xf32, #tpu.memory_space<vmem>>, vector<1x1024xf32>
    %cst_39 = arith.constant dense<0.000000e+00> : vector<1024xf32>
    %93 = vector.multi_reduction <add>, %90, %cst_39 [0] : vector<8x1024xf32> to vector<1024xf32>
    %94 = vector.shape_cast %93 : vector<1024xf32> to vector<1x1024xf32>
    %cst_40 = arith.constant 8.000000e+00 : f32
    %95 = vector.broadcast %cst_40 : f32 to vector<1x1024xf32>
    %96 = arith.divf %94, %95 : vector<1x1024xf32>
    %97 = vector.broadcast %96 : vector<1x1024xf32> to vector<8x1024xf32>
    %98 = arith.subf %90, %97 : vector<8x1024xf32>
    %99 = arith.mulf %98, %98 : vector<8x1024xf32>
    %cst_41 = arith.constant dense<0.000000e+00> : vector<1024xf32>
    %100 = vector.multi_reduction <add>, %99, %cst_41 [0] : vector<8x1024xf32> to vector<1024xf32>
    %101 = vector.shape_cast %100 : vector<1024xf32> to vector<1x1024xf32>
    %cst_42 = arith.constant 8.000000e+00 : f32
    %102 = vector.broadcast %cst_42 : f32 to vector<1x1024xf32>
    %103 = arith.divf %101, %102 : vector<1x1024xf32>
    %cst_43 = arith.constant 8.000000e-01 : f32
    %104 = vector.broadcast %cst_43 : f32 to vector<1x1024xf32>
    %105 = arith.addf %103, %104 : vector<1x1024xf32>
    %106 = math.rsqrt %105 : vector<1x1024xf32>
    %107 = arith.mulf %91, %106 : vector<1x1024xf32>
    %108 = arith.mulf %96, %107 : vector<1x1024xf32>
    %109 = arith.subf %92, %108 : vector<1x1024xf32>
    %110 = vector.broadcast %107 : vector<1x1024xf32> to vector<8x1024xf32>
    %111 = arith.mulf %90, %110 : vector<8x1024xf32>
    %112 = vector.broadcast %109 : vector<1x1024xf32> to vector<8x1024xf32>
    %113 = arith.addf %111, %112 : vector<8x1024xf32>
    %cst_44 = arith.constant 0.000000e+00 : f32
    %114 = vector.broadcast %cst_44 : f32 to vector<8x1024xf32>
    %115 = arith.cmpf ogt, %113, %114 : vector<8x1024xf32>
    %cst_45 = arith.constant 2.000000e-01 : f32
    %116 = vector.broadcast %cst_45 : f32 to vector<8x1024xf32>
    %117 = arith.mulf %116, %113 : vector<8x1024xf32>
    %118 = arith.select %115, %113, %117 : vector<8x1024xi1>, vector<8x1024xf32>
    %c3_i32_46 = arith.constant 3 : i32
    %119 = tpu.memref_slice %arg12[%c3_i32_46] : memref<4x!tpu.dma_semaphore, #tpu.memory_space<semaphore_mem>> -> memref<1x!tpu.dma_semaphore, #tpu.memory_space<semaphore_mem>>
    %120 = tpu.memref_squeeze %119 : memref<1x!tpu.dma_semaphore, #tpu.memory_space<semaphore_mem>> -> memref<!tpu.dma_semaphore, #tpu.memory_space<semaphore_mem>>
    tpu.wait_dma2 semaphore(%120 : memref<!tpu.dma_semaphore, #tpu.memory_space<semaphore_mem>>) src(%arg6 : memref<1024x256xbf16, #tpu.memory_space<any>>) dst(%arg11 : memref<1024x256xbf16, #tpu.memory_space<vmem>>)
    %c0_47 = arith.constant 0 : index
    %c0_48 = arith.constant 0 : index
    %121 = vector.load %arg11[%c0_47, %c0_48] : memref<1024x256xbf16, #tpu.memory_space<vmem>>, vector<1024x256xbf16>
    %122 = arith.truncf %118 : vector<8x1024xf32> to vector<8x1024xbf16>
    %cst_49 = arith.constant dense<0.000000e+00> : vector<8x256xf32>
    %123 = tpu.matmul %122, %121, %cst_49 {dimension_numbers = #tpu.dot_dimension_numbers<[1], [0], [0], [1], [0, 0, 1, 1], [], []>} : vector<8x1024xbf16>, vector<1024x256xbf16>, vector<8x256xf32> -> vector<8x256xf32>
    %c0_50 = arith.constant 0 : index
    %c3712 = arith.constant 3712 : index
    %124 = vector.load %arg2[%c0_50, %c3712] : memref<1x3968xf32, #tpu.memory_space<vmem>>, vector<1x256xf32>
    %125 = vector.broadcast %124 : vector<1x256xf32> to vector<8x256xf32>
    %126 = arith.addf %123, %125 : vector<8x256xf32>
    %127 = math.tanh %126 : vector<8x256xf32>
    %c0_51 = arith.constant 0 : index
    %c0_52 = arith.constant 0 : index
    %128 = vector.load %arg7[%c0_51, %c0_52] : memref<8x256xf32, #tpu.memory_space<vmem>>, vector<8x256xf32>
    tpu.vector_store %arg7[%c0_51, %c0_52], %127 {strides = array<i32>} : memref<8x256xf32, #tpu.memory_space<vmem>>, vector<8x256xf32>,
    return
  }
}

</mosaic_0001>

<llo_original>
// kernel: tpu_custom_call.1
$region0: #{tpu_custom_call.1}
  #allocation0 [shape = 'u32[]', space=smem, size = 0x4, offset = 0x4, fixed_abs, tag = 'smem constant byte address 0x4 - core index']
  #allocation1 [shape = 'u32[144,128]{1,0:T(1,128)}', space=vmem, size = 0x12000, scoped, tag = 'internal scratch']
  #allocation2 [shape = 'bf16[128,256]{1,0:T(16,128)(2,1)}', space=vmem, size = 0x10000, scoped, tag = 'scratch operand']
  #allocation3 [shape = 'bf16[256,512]{1,0:T(16,128)(2,1)}', space=vmem, size = 0x40000, scoped, tag = 'scratch operand']
  #allocation4 [shape = 'bf16[512,1024]{1,0:T(16,128)(2,1)}', space=vmem, size = 0x100000, scoped, tag = 'scratch operand']
  #allocation5 [shape = 'bf16[1024,256]{1,0:T(16,128)(2,1)}', space=vmem, size = 0x80000, scoped, tag = 'scratch operand']
  #allocation6 [shape = 's32[4]{0}', space=sflag, size = 0x10, scoped, tag = 'scratch operand']
  #allocation14 [shape = 's32[]', space=sflag, size = 0x4, offset = 0, fixed_abs, tag = 'sflag constant byte address 0x0 - dummy sync flag']
  #allocation16 [shape = 's32[]', space=sflag, size = 0x4, offset = 0, fixed_abs, tag = 'sflag constant byte address 0x0 - dummy sync flag']
  #allocation18 [shape = 's32[]', space=sflag, size = 0x4, offset = 0, fixed_abs, tag = 'sflag constant byte address 0x0 - dummy sync flag']
  #allocation20 [shape = 's32[]', space=sflag, size = 0x4, offset = 0, fixed_abs, tag = 'sflag constant byte address 0x0 - dummy sync flag']
  %s0 = inlined_call_operand.hbm [shape: f32[8,32], index: 0, kind: input, shape index: {}]
  %s1 = inlined_call_operand.hbm [shape: bf16[32,128], index: 1, kind: input, shape index: {}]
  %s2 = inlined_call_operand.hbm [shape: f32[1,3968], index: 2, kind: input, shape index: {}]
  %s3 = inlined_call_operand.hbm [shape: bf16[128,256], index: 3, kind: input, shape index: {}]
  %s4 = inlined_call_operand.hbm [shape: bf16[256,512], index: 4, kind: input, shape index: {}]
  %s5 = inlined_call_operand.hbm [shape: bf16[512,1024], index: 5, kind: input, shape index: {}]
  %s6 = inlined_call_operand.hbm [shape: bf16[1024,256], index: 6, kind: input, shape index: {}]
  %s7 = inlined_call_operand.hbm [shape: f32[8,256], index: 7, kind: output, shape index: {}]
  %s8 = sld [smem:[#allocation0]]
  $region34: #{tpu_custom_call.1} parent=0
    _
  %s10 = ssub.s32 1, %s8
  %s11 = scalar_select 0, %s10, %s8
  $region1: #{tpu_custom_call.1} parent=0
    #allocation7 [shape = 'u8[4096]{0}', space=vmem, size = 0x1000, scoped, tag = 'input window, operand 0, single buffered']
    #allocation8 [shape = 's32[1]{0}', space=sflag, size = 0x4, scoped, tag = 'scoped memory for tpu_custom_call.1']
    #allocation9 [shape = 's32[1]{0}', space=sflag, size = 0x4, scoped, tag = 'scoped memory for tpu_custom_call.1']
    #allocation10 [shape = 'u8[8192]{0}', space=vmem, size = 0x2000, scoped, tag = 'input window, operand 1, single buffered']
    #allocation11 [shape = 's32[1]{0}', space=sflag, size = 0x4, scoped, tag = 'scoped memory for tpu_custom_call.1']
    #allocation12 [shape = 'u8[15872]{0}', space=vmem, size = 0x4000, scoped, tag = 'input window, operand 2, single buffered']
    #allocation13 [shape = 'u8[8192]{0}', space=vmem, size = 0x2000, scoped, tag = 'output window, operand 0, single buffered']
    #allocation15 [shape = 'u32[9]{0}', space=smem, size = 0x24, scoped, tag = 'DMA stride descriptor']
    #allocation17 [shape = 'u32[9]{0}', space=smem, size = 0x24, scoped, tag = 'DMA stride descriptor']
    #allocation19 [shape = 'u32[9]{0}', space=smem, size = 0x24, scoped, tag = 'DMA stride descriptor']
    #allocation21 [shape = 'u32[9]{0}', space=smem, size = 0x24, scoped, tag = 'DMA stride descriptor']
    %12 = vsyncpa [#allocation8], 0
    %13 = vsyncpa [#allocation11], 0
    %14 = vsyncpa [#allocation9], 0
    // Predicated region
    $region2: #{tpu_custom_call.1} parent=1 // pred_check
      _
    $region3: #{tpu_custom_call.1} parent=1 // pred_check_branch
      %16 = sbr.rel (0) target = $region5
    $region4: #{tpu_custom_call.1} parent=1 // pred_region
      %s18 = ssub.s32 128, 128
      %19 = vsyncadd [#allocation8], %s18
      %s21 = sshll.u32 [#allocation7], 4
      %s22 = int_to_ptr.vmem [resolvable:$true] %s21
      %24 = dma.hbm_to_vmem [thread:$0]  %s0, 128, %s22, [#allocation8]
    $region5: #{tpu_custom_call.1} parent=1 // pred_fallthru
      _
    // Predicated region
    $region6: #{tpu_custom_call.1} parent=1 // pred_check
      _
    $region7: #{tpu_custom_call.1} parent=1 // pred_check_branch
      %26 = sbr.rel (0) target = $region9
    $region8: #{tpu_custom_call.1} parent=1 // pred_region
      %s28 = ssub.s32 256, 256
      %29 = vsyncadd [#allocation11], %s28
      %s30 = sshll.u32 [#allocation10], 4
      %s31 = int_to_ptr.vmem [resolvable:$true] %s30
      %36 = dma.hbm_to_vmem [thread:$0]  %s1, 256, %s31, [#allocation11], 64, 64, 4
    $region9: #{tpu_custom_call.1} parent=1 // pred_fallthru
      _
    // Predicated region
    $region10: #{tpu_custom_call.1} parent=1 // pred_check
      _
    $region11: #{tpu_custom_call.1} parent=1 // pred_check_branch
      %38 = sbr.rel (0) target = $region13
    $region12: #{tpu_custom_call.1} parent=1 // pred_region
      %s40 = ssub.s32 496, 496
      %41 = vsyncadd [#allocation11], %s40
      %s43 = sshll.u32 [#allocation12], 4
      %s44 = int_to_ptr.vmem [resolvable:$true] %s43
      %46 = dma.hbm_to_vmem [thread:$0]  %s2, 496, %s44, [#allocation11]
    $region13: #{tpu_custom_call.1} parent=1 // pred_fallthru
      _
    // Predicated region
    $region14: #{tpu_custom_call.1} parent=1 // pred_check
      _
    $region15: #{tpu_custom_call.1} parent=1 // pred_check_branch
      %48 = sbr.rel (0) target = $region17
    $region16: #{tpu_custom_call.1} parent=1 // pred_region
      %49 = dma.done [#allocation8], 128
    $region17: #{tpu_custom_call.1} parent=1 // pred_fallthru
      _
    // Predicated region
    $region18: #{tpu_custom_call.1} parent=1 // pred_check
      _
    $region19: #{tpu_custom_call.1} parent=1 // pred_check_branch
      %51 = sbr.rel (0) target = $region21
    $region20: #{tpu_custom_call.1} parent=1 // pred_region
      %52 = dma.done [#allocation11], 256
    $region21: #{tpu_custom_call.1} parent=1 // pred_fallthru
      _
    // Predicated region
    $region22: #{tpu_custom_call.1} parent=1 // pred_check
      _
    $region23: #{tpu_custom_call.1} parent=1 // pred_check_branch
      %54 = sbr.rel (0) target = $region25
    $region24: #{tpu_custom_call.1} parent=1 // pred_region
      %55 = dma.done [#allocation11], 496
    $region25: #{tpu_custom_call.1} parent=1 // pred_fallthru
      _
    %s58 = sshll.u32 1, 14
    %s59 = sxor.u32 4294967295, %s58
    %s61 = sld [smem:[#allocation0]]
    %s62 = sadd.s32 2, %s61
    %s64 = sshll.u32 7, 26
    %s65 = sxor.u32 4294967295, %s64
    %s66 = sand.u32 0, %s65
    %s67 = sshll.u32 %s62, 26
    %s68 = sor.u32 %s66, %s67
    %s69 = sshll.u32 [#allocation2], 4
    %s70 = int_to_ptr.vmem [resolvable:$true] %s69
    %73 = sst [smem:[#allocation15]] 256
    %s74 = scalar_lea.smem [#allocation15], 1
    %75 = sst [smem:[%s74]] 256
    %s76 = scalar_lea.smem [#allocation15], 2
    %77 = sst [smem:[%s76]] 2
    %s78 = scalar_lea.smem [#allocation15], 3
    %79 = sst [smem:[%s78]] 64
    %s80 = scalar_lea.smem [#allocation15], 4
    %81 = sst [smem:[%s80]] 128
    %s82 = scalar_lea.smem [#allocation15], 5
    %83 = sst [smem:[%s82]] 2
    %s84 = scalar_lea.smem [#allocation15], 6
    %85 = sst [smem:[%s84]] 128
    %s86 = scalar_lea.smem [#allocation15], 7
    %87 = sst [smem:[%s86]] 64
    %s88 = scalar_lea.smem [#allocation15], 8
    %89 = sst [smem:[%s88]] 4
    %91 = dma.general %s3, 2048, %s70, [#allocation6], [#allocation14], [#allocation15], %s68, 0
    %s92 = scalar_lea.sflag [#allocation6], 1
    %s94 = sshll.u32 1, 14
    %s95 = sxor.u32 4294967295, %s94
    %s97 = sadd.s32 2, %s61
    %s99 = sshll.u32 7, 26
    %s100 = sxor.u32 4294967295, %s99
    %s101 = sand.u32 0, %s100
    %s102 = sshll.u32 %s97, 26
    %s103 = sor.u32 %s101, %s102
    %s104 = sshll.u32 [#allocation3], 4
    %s105 = int_to_ptr.vmem [resolvable:$true] %s104
    %108 = sst [smem:[#allocation17]] 512
    %s109 = scalar_lea.smem [#allocation17], 1
    %110 = sst [smem:[%s109]] 512
    %s111 = scalar_lea.smem [#allocation17], 2
    %112 = sst [smem:[%s111]] 4
    %s113 = scalar_lea.smem [#allocation17], 3
    %114 = sst [smem:[%s113]] 64
    %s115 = scalar_lea.smem [#allocation17], 4
    %116 = sst [smem:[%s115]] 128
    %s117 = scalar_lea.smem [#allocation17], 5
    %118 = sst [smem:[%s117]] 2
    %s119 = scalar_lea.smem [#allocation17], 6
    %120 = sst [smem:[%s119]] 256
    %s121 = scalar_lea.smem [#allocation17], 7
    %122 = sst [smem:[%s121]] 64
    %s123 = scalar_lea.smem [#allocation17], 8
    %124 = sst [smem:[%s123]] 4
    %126 = dma.general %s4, 8192, %s105, %s92, [#allocation16], [#allocation17], %s103, 0
    %s127 = scalar_lea.sflag [#allocation6], 2
    %s129 = sshll.u32 1, 14
    %s130 = sxor.u32 4294967295, %s129
    %s132 = sadd.s32 2, %s61
    %s134 = sshll.u32 7, 26
    %s135 = sxor.u32 4294967295, %s134
    %s136 = sand.u32 0, %s135
    %s137 = sshll.u32 %s132, 26
    %s138 = sor.u32 %s136, %s137
    %s139 = sshll.u32 [#allocation4], 4
    %s140 = int_to_ptr.vmem [resolvable:$true] %s139
    %143 = sst [smem:[#allocation19]] 1024
    %s144 = scalar_lea.smem [#allocation19], 1
    %145 = sst [smem:[%s144]] 1024
    %s146 = scalar_lea.smem [#allocation19], 2
    %147 = sst [smem:[%s146]] 8
    %s148 = scalar_lea.smem [#allocation19], 3
    %149 = sst [smem:[%s148]] 64
    %s150 = scalar_lea.smem [#allocation19], 4
    %151 = sst [smem:[%s150]] 128
    %s152 = scalar_lea.smem [#allocation19], 5
    %153 = sst [smem:[%s152]] 2
    %s154 = scalar_lea.smem [#allocation19], 6
    %155 = sst [smem:[%s154]] 512
    %s156 = scalar_lea.smem [#allocation19], 7
    %157 = sst [smem:[%s156]] 64
    %s158 = scalar_lea.smem [#allocation19], 8
    %159 = sst [smem:[%s158]] 4
    %161 = dma.general %s5, 32768, %s140, %s127, [#allocation18], [#allocation19], %s138, 0
    %s162 = scalar_lea.sflag [#allocation6], 3
    %s164 = sshll.u32 1, 14
    %s165 = sxor.u32 4294967295, %s164
    %s167 = sadd.s32 2, %s61
    %s169 = sshll.u32 7, 26
    %s170 = sxor.u32 4294967295, %s169
    %s171 = sand.u32 0, %s170
    %s172 = sshll.u32 %s167, 26
    %s173 = sor.u32 %s171, %s172
    %s174 = sshll.u32 [#allocation5], 4
    %s175 = int_to_ptr.vmem [resolvable:$true] %s174
    %178 = sst [smem:[#allocation21]] 256
    %s179 = scalar_lea.smem [#allocation21], 1
    %180 = sst [smem:[%s179]] 256
    %s181 = scalar_lea.smem [#allocation21], 2
    %182 = sst [smem:[%s181]] 2
    %s183 = scalar_lea.smem [#allocation21], 3
    %184 = sst [smem:[%s183]] 64
    %s185 = scalar_lea.smem [#allocation21], 4
    %186 = sst [smem:[%s185]] 128
    %s187 = scalar_lea.smem [#allocation21], 5
    %188 = sst [smem:[%s187]] 2
    %s189 = scalar_lea.smem [#allocation21], 6
    %190 = sst [smem:[%s189]] 128
    %s191 = scalar_lea.smem [#allocation21], 7
    %192 = sst [smem:[%s191]] 64
    %s193 = scalar_lea.smem [#allocation21], 8
    %194 = sst [smem:[%s193]] 4
    %196 = dma.general %s6, 16384, %s175, %s162, [#allocation20], [#allocation21], %s173, 0
    %v197 = vld [vmem:[#allocation7] sm:$0xff]
    %v198 = vld [vmem:[#allocation10] sm:$0xf]
    %v199 = vld [vmem:[#allocation10 + $0x4] sm:$0xf]
    %v200 = vld [vmem:[#allocation10 + $0x8] sm:$0xf]
    %v201 = vld [vmem:[#allocation10 + $0xc] sm:$0xf]
    %v202 = vpack.c.bf16 %v197, %v197
    %v203 = vld [vmem:[#allocation12] sm:$0x1]
    %v205 = vlaneseq
    %v206 = vshrl.u32 %v205, 7
    %v207 = vsub.s32 0, %v206
    %v208 = vrot.slane %v203, %v207
    %v214 = vunpack.c.l.b16 %v198
    %v215 = vunpack.c.l.b16 %v199
    %v216 = vunpack.c.l.b16 %v200
    %v217 = vunpack.c.l.b16 %v201
    %v218 = vpack.c.b16 %v215, %v214
    %v219 = vpack.c.b16 %v217, %v216
    %vm222 = vcmask 261120
    %v224 = vsel %vm222, %v202, 0
    %226 = vmatprep.subr.bf16.mxu0 0
    %227 = vmatpush1.bf16.msra.mxu0 %v218
    %228 = vmatprep.subr.bf16.mxu0 0
    %229 = vmatpush1.bf16.msra.mxu0 %v219
    %230 = vmatprep.subr.bf16.mxu0 0
    %231 = vmatpush1.bf16.msra.mxu0 0
    %232 = vmatprep.subr.bf16.mxu0 0
    %233 = vmatpush1.bf16.msra.mxu0 0
    %234 = vmatprep.subr.bf16.mxu0 0
    %235 = vmatpush1.bf16.msra.mxu0 0
    %236 = vmatprep.subr.bf16.mxu0 0
    %237 = vmatpush1.bf16.msra.mxu0 0
    %238 = vmatprep.subr.bf16.mxu0 0
    %239 = vmatpush1.bf16.msra.mxu0 0
    %240 = vmatprep.subr.bf16.mxu0 0
    %241 = vmatpush1.bf16.msra.mxu0 0
    %242 = vmatprep.subr.bf16.mxu0 0
    %243 = vmatpush1.bf16.msra.mxu0 0
    %244 = vmatprep.subr.bf16.mxu0 0
    %245 = vmatpush1.bf16.msra.mxu0 0
    %246 = vmatprep.subr.bf16.mxu0 0
    %247 = vmatpush1.bf16.msra.mxu0 0
    %248 = vmatprep.subr.bf16.mxu0 0
    %249 = vmatpush1.bf16.msra.mxu0 0
    %250 = vmatprep.subr.bf16.mxu0 0
    %251 = vmatpush1.bf16.msra.mxu0 0
    %252 = vmatprep.subr.bf16.mxu0 0
    %253 = vmatpush1.bf16.msra.mxu0 0
    %254 = vmatprep.subr.bf16.mxu0 0
    %255 = vmatpush1.bf16.msra.mxu0 0
    %256 = vmatprep.subr.bf16.mxu0 0
    %257 = vmatpush1.bf16.msra.mxu0 0
    %258 = vmatprep.mubr.bf16.mxu0 0
    %259 = vmatmul.mubr.bf16.gmra.mrb[0].mxu0 %v224
    %v260 = vpop.f32.mrb[0].mxu0
    %v261 = vadd.f32 %v208, %v260
    %v262 = vpop.f32.mrb[0].mxu0
    %v263 = vpop.f32.mrb[0].mxu0
    %v264 = vpop.f32.mrb[0].mxu0
    %265 = vdwg.mxu0
    %vm266 = vcmp.gt.f32.partialorder %v261, 0.0
    %v267 = vmul.f32 %v261, 0.2
    %v268 = vsel %vm266, %v261, %v267
    %s269 = smul.u32 4, 16
    %s270 = smul.u32 %s269, 2
    %s271 = sshll.u32 %s270, 4
    %272 = dma.done [#allocation6], %s271
    %v273 = vld [vmem:[#allocation2] sm:$0xff]
    %v274 = vld [vmem:[#allocation2 + $0x8] sm:$0xff]
    %v275 = vld [vmem:[#allocation2 + $0x10] sm:$0xff]
    %v276 = vld [vmem:[#allocation2 + $0x18] sm:$0xff]
    %v277 = vld [vmem:[#allocation2 + $0x20] sm:$0xff]
    %v278 = vld [vmem:[#allocation2 + $0x28] sm:$0xff]
    %v279 = vld [vmem:[#allocation2 + $0x30] sm:$0xff]
    %v280 = vld [vmem:[#allocation2 + $0x38] sm:$0xff]
    %v281 = vld [vmem:[#allocation2 + $0x40] sm:$0xff]
    %v282 = vld [vmem:[#allocation2 + $0x48] sm:$0xff]
    %v283 = vld [vmem:[#allocation2 + $0x50] sm:$0xff]
    %v284 = vld [vmem:[#allocation2 + $0x58] sm:$0xff]
    %v285 = vld [vmem:[#allocation2 + $0x60] sm:$0xff]
    %v286 = vld [vmem:[#allocation2 + $0x68] sm:$0xff]
    %v287 = vld [vmem:[#allocation2 + $0x70] sm:$0xff]
    %v288 = vld [vmem:[#allocation2 + $0x78] sm:$0xff]
    %v289 = vpack.c.bf16 %v268, %v268
    %290 = vmatprep.subr.bf16.mxu0 %v274
    %291 = vmatpush1.bf16.msra.mxu0 %v273
    %292 = vmatprep.subr.bf16.mxu0 %v276
    %293 = vmatpush1.bf16.msra.mxu0 %v275
    %294 = vmatprep.subr.bf16.mxu0 %v278
    %295 = vmatpush1.bf16.msra.mxu0 %v277
    %296 = vmatprep.subr.bf16.mxu0 %v280
    %297 = vmatpush1.bf16.msra.mxu0 %v279
    %298 = vmatprep.subr.bf16.mxu0 %v282
    %299 = vmatpush1.bf16.msra.mxu0 %v281
    %300 = vmatprep.subr.bf16.mxu0 %v284
    %301 = vmatpush1.bf16.msra.mxu0 %v283
    %302 = vmatprep.subr.bf16.mxu0 %v286
    %303 = vmatpush1.bf16.msra.mxu0 %v285
    %304 = vmatprep.subr.bf16.mxu0 %v288
    %305 = vmatpush1.bf16.msra.mxu0 %v287
    %306 = vmatprep.subr.bf16.mxu0 0
    %307 = vmatpush1.bf16.msra.mxu0 0
    %308 = vmatprep.subr.bf16.mxu0 0
    %309 = vmatpush1.bf16.msra.mxu0 0
    %310 = vmatprep.subr.bf16.mxu0 0
    %311 = vmatpush1.bf16.msra.mxu0 0
    %312 = vmatprep.subr.bf16.mxu0 0
    %313 = vmatpush1.bf16.msra.mxu0 0
    %314 = vmatprep.subr.bf16.mxu0 0
    %315 = vmatpush1.bf16.msra.mxu0 0
    %316 = vmatprep.subr.bf16.mxu0 0
    %317 = vmatpush1.bf16.msra.mxu0 0
    %318 = vmatprep.subr.bf16.mxu0 0
    %319 = vmatpush1.bf16.msra.mxu0 0
    %320 = vmatprep.subr.bf16.mxu0 0
    %321 = vmatpush1.bf16.msra.mxu0 0
    %322 = vmatprep.mubr.bf16.mxu0 0
    %323 = vmatmul.mubr.bf16.gmra.mrb[0].mxu0 %v289
    %v324 = vpop.f32.mrb[0].mxu0
    %v325 = vadd.f32 0.0, %v324
    %v326 = vpop.f32.mrb[0].mxu0
    %v327 = vadd.f32 0.0, %v326
    %v328 = vpop.f32.mrb[0].mxu0
    %v329 = vpop.f32.mrb[0].mxu0
    %330 = vdwg.mxu0
    %v331 = vld [vmem:[#allocation12 + $0x1] sm:$0x3]
    %v332 = vld [vmem:[#allocation12 + $0x3] sm:$0x3]
    %v333 = vrot.slane %v325, 4
    %v334 = vadd.f32 %v325, %v333
    %v335 = vrot.slane %v334, 2
    %v336 = vadd.f32 %v334, %v335
    %v337 = vrot.slane %v336, 1
    %v338 = vadd.f32 %v336, %v337
    %v339 = vrot.slane %v327, 4
    %v340 = vadd.f32 %v327, %v339
    %v341 = vrot.slane %v340, 2
    %v342 = vadd.f32 %v340, %v341
    %v343 = vrot.slane %v342, 1
    %v344 = vadd.f32 %v342, %v343
    %v345 = vrcp.pop 8.0
    %v346 = vmul.f32 %v338, %v345
    %v347 = vmul.f32 %v344, %v345
    %v348 = vsub.f32 %v325, %v346
    %v349 = vsub.f32 %v327, %v347
    %v350 = vmul.f32 %v348, %v348
    %v351 = vmul.f32 %v349, %v349
    %v352 = vrot.slane %v350, 4
    %v353 = vadd.f32 %v350, %v352
    %v354 = vrot.slane %v353, 2
    %v355 = vadd.f32 %v353, %v354
    %v356 = vrot.slane %v355, 1
    %v357 = vadd.f32 %v355, %v356
    %v358 = vrot.slane %v351, 4
    %v359 = vadd.f32 %v351, %v358
    %v360 = vrot.slane %v359, 2
    %v361 = vadd.f32 %v359, %v360
    %v362 = vrot.slane %v361, 1
    %v363 = vadd.f32 %v361, %v362
    %v364 = vmul.f32 %v357, %v345
    %v365 = vmul.f32 %v363, %v345
    %v366 = vadd.f32 %v364, 0.8
    %v367 = vadd.f32 %v365, 0.8
    %v368 = vrsqrt.pop %v366
    %v369 = vrsqrt.pop %v367
    %v372 = vcombine.low %v368, %v369
    %v374 = vunpack.c.l.s4 1966171168
    %v375 = vunpack.c.0.s8 %v374
    %v376 = vlaneseq
    %v377 = vshrl.u32 %v376, 7
    %v378 = vsub.s32 %v375, %v377
    %v379 = vrot.slane %v372, %v378
    %v381 = vunpack.c.l.s4 1966171168
    %v382 = vunpack.c.0.s8 %v381
    %v383 = vlaneseq
    %v384 = vshrl.u32 %v383, 7
    %v385 = vsub.s32 %v382, %v384
    %v386 = vrot.slane %v379, %v385
    %v388 = vmul.f32 %v331, %v386
    %v390 = vlaneseq
    %v391 = vshrl.u32 %v390, 7
    %v392 = vsub.s32 0, %v391
    %v393 = vrot.slane %v388, %v392
    %v394 = vlaneseq
    %v395 = vshrl.u32 %v394, 7
    %v396 = vsub.s32 1, %v395
    %v397 = vrot.slane %v388, %v396
    %v400 = vmul.f32 %v346, %v393
    %v401 = vmul.f32 %v347, %v397
    %v404 = vcombine.low %v400, %v401
    %v406 = vunpack.c.l.s4 1966171168
    %v407 = vunpack.c.0.s8 %v406
    %v408 = vlaneseq
    %v409 = vshrl.u32 %v408, 7
    %v410 = vsub.s32 %v407, %v409
    %v411 = vrot.slane %v404, %v410
    %v413 = vunpack.c.l.s4 1966171168
    %v414 = vunpack.c.0.s8 %v413
    %v415 = vlaneseq
    %v416 = vshrl.u32 %v415, 7
    %v417 = vsub.s32 %v414, %v416
    %v418 = vrot.slane %v411, %v417
    %v420 = vsub.f32 %v332, %v418
    %v421 = vmul.f32 %v325, %v393
    %v422 = vmul.f32 %v327, %v397
    %v424 = vlaneseq
    %v425 = vshrl.u32 %v424, 7
    %v426 = vsub.s32 0, %v425
    %v427 = vrot.slane %v420, %v426
    %v428 = vlaneseq
    %v429 = vshrl.u32 %v428, 7
    %v430 = vsub.s32 1, %v429
    %v431 = vrot.slane %v420, %v430
    %v434 = vadd.f32 %v421, %v427
    %v435 = vadd.f32 %v422, %v431
    %vm436 = vcmp.gt.f32.partialorder %v434, 0.0
    %vm437 = vcmp.gt.f32.partialorder %v435, 0.0
    %v438 = vmul.f32 %v434, 0.2
    %v439 = vmul.f32 %v435, 0.2
    %v440 = vsel %vm436, %v434, %v438
    %v441 = vsel %vm437, %v435, %v439
    %s442 = smul.u32 4, 32
    %s443 = smul.u32 %s442, 4
    %s444 = sshll.u32 %s443, 4
    %445 = dma.done %s92, %s444
    %v446 = vld [vmem:[#allocation3] sm:$0xff]
    %v447 = vld [vmem:[#allocation3 + $0x8] sm:$0xff]
    %v448 = vld [vmem:[#allocation3 + $0x10] sm:$0xff]
    %v449 = vld [vmem:[#allocation3 + $0x18] sm:$0xff]
    %v450 = vld [vmem:[#allocation3 + $0x20] sm:$0xff]
    %v451 = vld [vmem:[#allocation3 + $0x28] sm:$0xff]
    %v452 = vld [vmem:[#allocation3 + $0x30] sm:$0xff]
    %v453 = vld [vmem:[#allocation3 + $0x38] sm:$0xff]
    %v454 = vld [vmem:[#allocation3 + $0x40] sm:$0xff]
    %v455 = vld [vmem:[#allocation3 + $0x48] sm:$0xff]
    %v456 = vld [vmem:[#allocation3 + $0x50] sm:$0xff]
    %v457 = vld [vmem:[#allocation3 + $0x58] sm:$0xff]
    %v458 = vld [vmem:[#allocation3 + $0x60] sm:$0xff]
    %v459 = vld [vmem:[#allocation3 + $0x68] sm:$0xff]
    %v460 = vld [vmem:[#allocation3 + $0x70] sm:$0xff]
    %v461 = vld [vmem:[#allocation3 + $0x78] sm:$0xff]
    %v462 = vld [vmem:[#allocation3 + $0x80] sm:$0xff]
    %v463 = vld [vmem:[#allocation3 + $0x88] sm:$0xff]
    %v464 = vld [vmem:[#allocation3 + $0x90] sm:$0xff]
    %v465 = vld [vmem:[#allocation3 + $0x98] sm:$0xff]
    %v466 = vld [vmem:[#allocation3 + $0xa0] sm:$0xff]
    %v467 = vld [vmem:[#allocation3 + $0xa8] sm:$0xff]
    %v468 = vld [vmem:[#allocation3 + $0xb0] sm:$0xff]
    %v469 = vld [vmem:[#allocation3 + $0xb8] sm:$0xff]
    %v470 = vld [vmem:[#allocation3 + $0xc0] sm:$0xff]
    %v471 = vld [vmem:[#allocation3 + $0xc8] sm:$0xff]
    %v472 = vld [vmem:[#allocation3 + $0xd0] sm:$0xff]
    %v473 = vld [vmem:[#allocation3 + $0xd8] sm:$0xff]
    %v474 = vld [vmem:[#allocation3 + $0xe0] sm:$0xff]
    %v475 = vld [vmem:[#allocation3 + $0xe8] sm:$0xff]
    %v476 = vld [vmem:[#allocation3 + $0xf0] sm:$0xff]
    %v477 = vld [vmem:[#allocation3 + $0xf8] sm:$0xff]
    %v478 = vld [vmem:[#allocation3 + $0x100] sm:$0xff]
    %v479 = vld [vmem:[#allocation3 + $0x108] sm:$0xff]
    %v480 = vld [vmem:[#allocation3 + $0x110] sm:$0xff]
    %v481 = vld [vmem:[#allocation3 + $0x118] sm:$0xff]
    %v482 = vld [vmem:[#allocation3 + $0x120] sm:$0xff]
    %v483 = vld [vmem:[#allocation3 + $0x128] sm:$0xff]
    %v484 = vld [vmem:[#allocation3 + $0x130] sm:$0xff]
    %v485 = vld [vmem:[#allocation3 + $0x138] sm:$0xff]
    %v486 = vld [vmem:[#allocation3 + $0x140] sm:$0xff]
    %v487 = vld [vmem:[#allocation3 + $0x148] sm:$0xff]
    %v488 = vld [vmem:[#allocation3 + $0x150] sm:$0xff]
    %v489 = vld [vmem:[#allocation3 + $0x158] sm:$0xff]
    %v490 = vld [vmem:[#allocation3 + $0x160] sm:$0xff]
    %v491 = vld [vmem:[#allocation3 + $0x168] sm:$0xff]
    %v492 = vld [vmem:[#allocation3 + $0x170] sm:$0xff]
    %v493 = vld [vmem:[#allocation3 + $0x178] sm:$0xff]
    %v494 = vld [vmem:[#allocation3 + $0x180] sm:$0xff]
    %v495 = vld [vmem:[#allocation3 + $0x188] sm:$0xff]
    %v496 = vld [vmem:[#allocation3 + $0x190] sm:$0xff]
    %v497 = vld [vmem:[#allocation3 + $0x198] sm:$0xff]
    %v498 = vld [vmem:[#allocation3 + $0x1a0] sm:$0xff]
    %v499 = vld [vmem:[#allocation3 + $0x1a8] sm:$0xff]
    %v500 = vld [vmem:[#allocation3 + $0x1b0] sm:$0xff]
    %v501 = vld [vmem:[#allocation3 + $0x1b8] sm:$0xff]
    %v502 = vld [vmem:[#allocation3 + $0x1c0] sm:$0xff]
    %v503 = vld [vmem:[#allocation3 + $0x1c8] sm:$0xff]
    %v504 = vld [vmem:[#allocation3 + $0x1d0] sm:$0xff]
    %v505 = vld [vmem:[#allocation3 + $0x1d8] sm:$0xff]
    %v506 = vld [vmem:[#allocation3 + $0x1e0] sm:$0xff]
    %v507 = vld [vmem:[#allocation3 + $0x1e8] sm:$0xff]
    %v508 = vld [vmem:[#allocation3 + $0x1f0] sm:$0xff]
    %v509 = vld [vmem:[#allocation3 + $0x1f8] sm:$0xff]
    %v510 = vpack.c.bf16 %v440, %v440
    %v511 = vpack.c.bf16 %v441, %v441
    %512 = vmatprep.subr.bf16.mxu0 %v447
    %513 = vmatpush1.bf16.msra.mxu0 %v446
    %514 = vmatprep.subr.bf16.mxu0 %v451
    %515 = vmatpush1.bf16.msra.mxu0 %v450
    %516 = vmatprep.subr.bf16.mxu0 %v455
    %517 = vmatpush1.bf16.msra.mxu0 %v454
    %518 = vmatprep.subr.bf16.mxu0 %v459
    %519 = vmatpush1.bf16.msra.mxu0 %v458
    %520 = vmatprep.subr.bf16.mxu0 %v463
    %521 = vmatpush1.bf16.msra.mxu0 %v462
    %522 = vmatprep.subr.bf16.mxu0 %v467
    %523 = vmatpush1.bf16.msra.mxu0 %v466
    %524 = vmatprep.subr.bf16.mxu0 %v471
    %525 = vmatpush1.bf16.msra.mxu0 %v470
    %526 = vmatprep.subr.bf16.mxu0 %v475
    %527 = vmatpush1.bf16.msra.mxu0 %v474
    %528 = vmatprep.subr.bf16.mxu0 %v479
    %529 = vmatpush1.bf16.msra.mxu0 %v478
    %530 = vmatprep.subr.bf16.mxu0 %v483
    %531 = vmatpush1.bf16.msra.mxu0 %v482
    %532 = vmatprep.subr.bf16.mxu0 %v487
    %533 = vmatpush1.bf16.msra.mxu0 %v486
    %534 = vmatprep.subr.bf16.mxu0 %v491
    %535 = vmatpush1.bf16.msra.mxu0 %v490
    %536 = vmatprep.subr.bf16.mxu0 %v495
    %537 = vmatpush1.bf16.msra.mxu0 %v494
    %538 = vmatprep.subr.bf16.mxu0 %v499
    %539 = vmatpush1.bf16.msra.mxu0 %v498
    %540 = vmatprep.subr.bf16.mxu0 %v503
    %541 = vmatpush1.bf16.msra.mxu0 %v502
    %542 = vmatprep.subr.bf16.mxu0 %v507
    %543 = vmatpush1.bf16.msra.mxu0 %v506
    %544 = vmatprep.mubr.bf16.mxu0 %v511
    %545 = vmatmul.mubr.bf16.gmra.mrb[0].mxu0 %v510
    %v546 = vpop.f32.mrb[0].mxu0
    %v547 = vadd.f32 0.0, %v546
    %v548 = vpop.f32.mrb[0].mxu0
    %v549 = vadd.f32 0.0, %v548
    %v550 = vpop.f32.mrb[0].mxu0
    %v551 = vpop.f32.mrb[0].mxu0
    %552 = vdwg.mxu0
    %553 = vmatprep.subr.bf16.mxu0 %v449
    %554 = vmatpush1.bf16.msra.mxu0 %v448
    %555 = vmatprep.subr.bf16.mxu0 %v453
    %556 = vmatpush1.bf16.msra.mxu0 %v452
    %557 = vmatprep.subr.bf16.mxu0 %v457
    %558 = vmatpush1.bf16.msra.mxu0 %v456
    %559 = vmatprep.subr.bf16.mxu0 %v461
    %560 = vmatpush1.bf16.msra.mxu0 %v460
    %561 = vmatprep.subr.bf16.mxu0 %v465
    %562 = vmatpush1.bf16.msra.mxu0 %v464
    %563 = vmatprep.subr.bf16.mxu0 %v469
    %564 = vmatpush1.bf16.msra.mxu0 %v468
    %565 = vmatprep.subr.bf16.mxu0 %v473
    %566 = vmatpush1.bf16.msra.mxu0 %v472
    %567 = vmatprep.subr.bf16.mxu0 %v477
    %568 = vmatpush1.bf16.msra.mxu0 %v476
    %569 = vmatprep.subr.bf16.mxu0 %v481
    %570 = vmatpush1.bf16.msra.mxu0 %v480
    %571 = vmatprep.subr.bf16.mxu0 %v485
    %572 = vmatpush1.bf16.msra.mxu0 %v484
    %573 = vmatprep.subr.bf16.mxu0 %v489
    %574 = vmatpush1.bf16.msra.mxu0 %v488
    %575 = vmatprep.subr.bf16.mxu0 %v493
    %576 = vmatpush1.bf16.msra.mxu0 %v492
    %577 = vmatprep.subr.bf16.mxu0 %v497
    %578 = vmatpush1.bf16.msra.mxu0 %v496
    %579 = vmatprep.subr.bf16.mxu0 %v501
    %580 = vmatpush1.bf16.msra.mxu0 %v500
    %581 = vmatprep.subr.bf16.mxu0 %v505
    %582 = vmatpush1.bf16.msra.mxu0 %v504
    %583 = vmatprep.subr.bf16.mxu0 %v509
    %584 = vmatpush1.bf16.msra.mxu0 %v508
    %585 = vmatprep.mubr.bf16.mxu0 %v511
    %586 = vmatmul.mubr.bf16.gmra.mrb[0].mxu0 %v510
    %v587 = vpop.f32.mrb[0].mxu0
    %v588 = vadd.f32 0.0, %v587
    %v589 = vpop.f32.mrb[0].mxu0
    %v590 = vadd.f32 0.0, %v589
    %v591 = vpop.f32.mrb[0].mxu0
    %v592 = vpop.f32.mrb[0].mxu0
    %593 = vdwg.mxu0
    %v594 = vld [vmem:[#allocation12 + $0x5] sm:$0xf]
    %v595 = vld [vmem:[#allocation12 + $0x9] sm:$0xf]
    %v596 = vrot.slane %v547, 4
    %v597 = vadd.f32 %v547, %v596
    %v598 = vrot.slane %v597, 2
    %v599 = vadd.f32 %v597, %v598
    %v600 = vrot.slane %v599, 1
    %v601 = vadd.f32 %v599, %v600
    %v602 = vrot.slane %v549, 4
    %v603 = vadd.f32 %v549, %v602
    %v604 = vrot.slane %v603, 2
    %v605 = vadd.f32 %v603, %v604
    %v606 = vrot.slane %v605, 1
    %v607 = vadd.f32 %v605, %v606
    %v608 = vrot.slane %v588, 4
    %v609 = vadd.f32 %v588, %v608
    %v610 = vrot.slane %v609, 2
    %v611 = vadd.f32 %v609, %v610
    %v612 = vrot.slane %v611, 1
    %v613 = vadd.f32 %v611, %v612
    %v614 = vrot.slane %v590, 4
    %v615 = vadd.f32 %v590, %v614
    %v616 = vrot.slane %v615, 2
    %v617 = vadd.f32 %v615, %v616
    %v618 = vrot.slane %v617, 1
    %v619 = vadd.f32 %v617, %v618
    %v620 = vmul.f32 %v601, %v345
    %v621 = vmul.f32 %v607, %v345
    %v622 = vmul.f32 %v613, %v345
    %v623 = vmul.f32 %v619, %v345
    %v624 = vsub.f32 %v547, %v620
    %v625 = vsub.f32 %v549, %v621
    %v626 = vsub.f32 %v588, %v622
    %v627 = vsub.f32 %v590, %v623
    %v628 = vmul.f32 %v624, %v624
    %v629 = vmul.f32 %v625, %v625
    %v630 = vmul.f32 %v626, %v626
    %v631 = vmul.f32 %v627, %v627
    %v632 = vrot.slane %v628, 4
    %v633 = vadd.f32 %v628, %v632
    %v634 = vrot.slane %v633, 2
    %v635 = vadd.f32 %v633, %v634
    %v636 = vrot.slane %v635, 1
    %v637 = vadd.f32 %v635, %v636
    %v638 = vrot.slane %v629, 4
    %v639 = vadd.f32 %v629, %v638
    %v640 = vrot.slane %v639, 2
    %v641 = vadd.f32 %v639, %v640
    %v642 = vrot.slane %v641, 1
    %v643 = vadd.f32 %v641, %v642
    %v644 = vrot.slane %v630, 4
    %v645 = vadd.f32 %v630, %v644
    %v646 = vrot.slane %v645, 2
    %v647 = vadd.f32 %v645, %v646
    %v648 = vrot.slane %v647, 1
    %v649 = vadd.f32 %v647, %v648
    %v650 = vrot.slane %v631, 4
    %v651 = vadd.f32 %v631, %v650
    %v652 = vrot.slane %v651, 2
    %v653 = vadd.f32 %v651, %v652
    %v654 = vrot.slane %v653, 1
    %v655 = vadd.f32 %v653, %v654
    %v656 = vmul.f32 %v637, %v345
    %v657 = vmul.f32 %v643, %v345
    %v658 = vmul.f32 %v649, %v345
    %v659 = vmul.f32 %v655, %v345
    %v660 = vadd.f32 %v656, 0.8
    %v661 = vadd.f32 %v657, 0.8
    %v662 = vadd.f32 %v658, 0.8
    %v663 = vadd.f32 %v659, 0.8
    %v664 = vrsqrt.pop %v660
    %v665 = vrsqrt.pop %v661
    %v666 = vrsqrt.pop %v662
    %v667 = vrsqrt.pop %v663
    %v672 = vcombine.low %v664, %v665
    %v673 = vcombine.low %v666, %v667
    %v675 = vunpack.c.l.s4 1966171168
    %v676 = vunpack.c.0.s8 %v675
    %v677 = vlaneseq
    %v678 = vshrl.u32 %v677, 7
    %v679 = vsub.s32 %v676, %v678
    %v680 = vrot.slane %v672, %v679
    %v682 = vunpack.c.l.s4 1966171168
    %v683 = vunpack.c.0.s8 %v682
    %v684 = vlaneseq
    %v685 = vshrl.u32 %v684, 7
    %v686 = vsub.s32 %v683, %v685
    %v687 = vrot.slane %v673, %v686
    %v688 = vcombine.low %v680, %v687
    %v690 = vunpack.c.l.s4 1966171168
    %v691 = vunpack.c.0.s8 %v690
    %v692 = vlaneseq
    %v693 = vshrl.u32 %v692, 7
    %v694 = vsub.s32 %v691, %v693
    %v695 = vrot.slane %v688, %v694
    %v697 = vmul.f32 %v594, %v695
    %v699 = vlaneseq
    %v700 = vshrl.u32 %v699, 7
    %v701 = vsub.s32 0, %v700
    %v702 = vrot.slane %v697, %v701
    %v703 = vlaneseq
    %v704 = vshrl.u32 %v703, 7
    %v705 = vsub.s32 1, %v704
    %v706 = vrot.slane %v697, %v705
    %v707 = vlaneseq
    %v708 = vshrl.u32 %v707, 7
    %v709 = vsub.s32 2, %v708
    %v710 = vrot.slane %v697, %v709
    %v711 = vlaneseq
    %v712 = vshrl.u32 %v711, 7
    %v713 = vsub.s32 3, %v712
    %v714 = vrot.slane %v697, %v713
    %v719 = vmul.f32 %v620, %v702
    %v720 = vmul.f32 %v621, %v706
    %v721 = vmul.f32 %v622, %v710
    %v722 = vmul.f32 %v623, %v714
    %v727 = vcombine.low %v719, %v720
    %v728 = vcombine.low %v721, %v722
    %v730 = vunpack.c.l.s4 1966171168
    %v731 = vunpack.c.0.s8 %v730
    %v732 = vlaneseq
    %v733 = vshrl.u32 %v732, 7
    %v734 = vsub.s32 %v731, %v733
    %v735 = vrot.slane %v727, %v734
    %v737 = vunpack.c.l.s4 1966171168
    %v738 = vunpack.c.0.s8 %v737
    %v739 = vlaneseq
    %v740 = vshrl.u32 %v739, 7
    %v741 = vsub.s32 %v738, %v740
    %v742 = vrot.slane %v728, %v741
    %v743 = vcombine.low %v735, %v742
    %v745 = vunpack.c.l.s4 1966171168
    %v746 = vunpack.c.0.s8 %v745
    %v747 = vlaneseq
    %v748 = vshrl.u32 %v747, 7
    %v749 = vsub.s32 %v746, %v748
    %v750 = vrot.slane %v743, %v749
    %v752 = vsub.f32 %v595, %v750
    %v753 = vmul.f32 %v547, %v702
    %v754 = vmul.f32 %v549, %v706
    %v755 = vmul.f32 %v588, %v710
    %v756 = vmul.f32 %v590, %v714
    %v758 = vlaneseq
    %v759 = vshrl.u32 %v758, 7
    %v760 = vsub.s32 0, %v759
    %v761 = vrot.slane %v752, %v760
    %v762 = vlaneseq
    %v763 = vshrl.u32 %v762, 7
    %v764 = vsub.s32 1, %v763
    %v765 = vrot.slane %v752, %v764
    %v766 = vlaneseq
    %v767 = vshrl.u32 %v766, 7
    %v768 = vsub.s32 2, %v767
    %v769 = vrot.slane %v752, %v768
    %v770 = vlaneseq
    %v771 = vshrl.u32 %v770, 7
    %v772 = vsub.s32 3, %v771
    %v773 = vrot.slane %v752, %v772
    %v778 = vadd.f32 %v753, %v761
    %v779 = vadd.f32 %v754, %v765
    %v780 = vadd.f32 %v755, %v769
    %v781 = vadd.f32 %v756, %v773
    %vm782 = vcmp.gt.f32.partialorder %v778, 0.0
    %vm783 = vcmp.gt.f32.partialorder %v779, 0.0
    %vm784 = vcmp.gt.f32.partialorder %v780, 0.0
    %vm785 = vcmp.gt.f32.partialorder %v781, 0.0
    %v786 = vmul.f32 %v778, 0.2
    %v787 = vmul.f32 %v779, 0.2
    %v788 = vmul.f32 %v780, 0.2
    %v789 = vmul.f32 %v781, 0.2
    %v790 = vsel %vm782, %v778, %v786
    %v791 = vsel %vm783, %v779, %v787
    %v792 = vsel %vm784, %v780, %v788
    %v793 = vsel %vm785, %v781, %v789
    %s794 = smul.u32 4, 64
    %s795 = smul.u32 %s794, 8
    %s796 = sshll.u32 %s795, 4
    %797 = dma.done %s127, %s796
    %v798 = vld [vmem:[#allocation4] sm:$0xff]
    %v799 = vld [vmem:[#allocation4 + $0x8] sm:$0xff]
    %v800 = vld [vmem:[#allocation4 + $0x10] sm:$0xff]
    %v801 = vld [vmem:[#allocation4 + $0x18] sm:$0xff]
    %v802 = vld [vmem:[#allocation4 + $0x20] sm:$0xff]
    %v803 = vld [vmem:[#allocation4 + $0x28] sm:$0xff]
    %v804 = vld [vmem:[#allocation4 + $0x30] sm:$0xff]
    %v805 = vld [vmem:[#allocation4 + $0x38] sm:$0xff]
    %v806 = vld [vmem:[#allocation4 + $0x40] sm:$0xff]
    %v807 = vld [vmem:[#allocation4 + $0x48] sm:$0xff]
    %v808 = vld [vmem:[#allocation4 + $0x50] sm:$0xff]
    %v809 = vld [vmem:[#allocation4 + $0x58] sm:$0xff]
    %v810 = vld [vmem:[#allocation4 + $0x60] sm:$0xff]
    %v811 = vld [vmem:[#allocation4 + $0x68] sm:$0xff]
    %v812 = vld [vmem:[#allocation4 + $0x70] sm:$0xff]
    %v813 = vld [vmem:[#allocation4 + $0x78] sm:$0xff]
    %v814 = vld [vmem:[#allocation4 + $0x80] sm:$0xff]
    %v815 = vld [vmem:[#allocation4 + $0x88] sm:$0xff]
    %v816 = vld [vmem:[#allocation4 + $0x90] sm:$0xff]
    %v817 = vld [vmem:[#allocation4 + $0x98] sm:$0xff]
    %v818 = vld [vmem:[#allocation4 + $0xa0] sm:$0xff]
    %v819 = vld [vmem:[#allocation4 + $0xa8] sm:$0xff]
    %v820 = vld [vmem:[#allocation4 + $0xb0] sm:$0xff]
    %v821 = vld [vmem:[#allocation4 + $0xb8] sm:$0xff]
    %v822 = vld [vmem:[#allocation4 + $0xc0] sm:$0xff]
    %v823 = vld [vmem:[#allocation4 + $0xc8] sm:$0xff]
    %v824 = vld [vmem:[#allocation4 + $0xd0] sm:$0xff]
    %v825 = vld [vmem:[#allocation4 + $0xd8] sm:$0xff]
    %v826 = vld [vmem:[#allocation4 + $0xe0] sm:$0xff]
    %v827 = vld [vmem:[#allocation4 + $0xe8] sm:$0xff]
    %v828 = vld [vmem:[#allocation4 + $0xf0] sm:$0xff]
    %v829 = vld [vmem:[#allocation4 + $0xf8] sm:$0xff]
    %v830 = vld [vmem:[#allocation4 + $0x100] sm:$0xff]
    %v831 = vld [vmem:[#allocation4 + $0x108] sm:$0xff]
    %v832 = vld [vmem:[#allocation4 + $0x110] sm:$0xff]
    %v833 = vld [vmem:[#allocation4 + $0x118] sm:$0xff]
    %v834 = vld [vmem:[#allocation4 + $0x120] sm:$0xff]
    %v835 = vld [vmem:[#allocation4 + $0x128] sm:$0xff]
    %v836 = vld [vmem:[#allocation4 + $0x130] sm:$0xff]
    %v837 = vld [vmem:[#allocation4 + $0x138] sm:$0xff]
    %v838 = vld [vmem:[#allocation4 + $0x140] sm:$0xff]
    %v839 = vld [vmem:[#allocation4 + $0x148] sm:$0xff]
    %v840 = vld [vmem:[#allocation4 + $0x150] sm:$0xff]
    %v841 = vld [vmem:[#allocation4 + $0x158] sm:$0xff]
    %v842 = vld [vmem:[#allocation4 + $0x160] sm:$0xff]
    %v843 = vld [vmem:[#allocation4 + $0x168] sm:$0xff]
    %v844 = vld [vmem:[#allocation4 + $0x170] sm:$0xff]
    %v845 = vld [vmem:[#allocation4 + $0x178] sm:$0xff]
    %v846 = vld [vmem:[#allocation4 + $0x180] sm:$0xff]
    %v847 = vld [vmem:[#allocation4 + $0x188] sm:$0xff]
    %v848 = vld [vmem:[#allocation4 + $0x190] sm:$0xff]
    %v849 = vld [vmem:[#allocation4 + $0x198] sm:$0xff]
    %v850 = vld [vmem:[#allocation4 + $0x1a0] sm:$0xff]
    %v851 = vld [vmem:[#allocation4 + $0x1a8] sm:$0xff]
    %v852 = vld [vmem:[#allocation4 + $0x1b0] sm:$0xff]
    %v853 = vld [vmem:[#allocation4 + $0x1b8] sm:$0xff]
    %v854 = vld [vmem:[#allocation4 + $0x1c0] sm:$0xff]
    %v855 = vld [vmem:[#allocation4 + $0x1c8] sm:$0xff]
    %v856 = vld [vmem:[#allocation4 + $0x1d0] sm:$0xff]
    %v857 = vld [vmem:[#allocation4 + $0x1d8] sm:$0xff]
    %v858 = vld [vmem:[#allocation4 + $0x1e0] sm:$0xff]
    %v859 = vld [vmem:[#allocation4 + $0x1e8] sm:$0xff]
    %v860 = vld [vmem:[#allocation4 + $0x1f0] sm:$0xff]
    %v861 = vld [vmem:[#allocation4 + $0x1f8] sm:$0xff]
    %v862 = vld [vmem:[#allocation4 + $0x200] sm:$0xff]
    %v863 = vld [vmem:[#allocation4 + $0x208] sm:$0xff]
    %v864 = vld [vmem:[#allocation4 + $0x210] sm:$0xff]
    %v865 = vld [vmem:[#allocation4 + $0x218] sm:$0xff]
    %v866 = vld [vmem:[#allocation4 + $0x220] sm:$0xff]
    %v867 = vld [vmem:[#allocation4 + $0x228] sm:$0xff]
    %v868 = vld [vmem:[#allocation4 + $0x230] sm:$0xff]
    %v869 = vld [vmem:[#allocation4 + $0x238] sm:$0xff]
    %v870 = vld [vmem:[#allocation4 + $0x240] sm:$0xff]
    %v871 = vld [vmem:[#allocation4 + $0x248] sm:$0xff]
    %v872 = vld [vmem:[#allocation4 + $0x250] sm:$0xff]
    %v873 = vld [vmem:[#allocation4 + $0x258] sm:$0xff]
    %v874 = vld [vmem:[#allocation4 + $0x260] sm:$0xff]
    %v875 = vld [vmem:[#allocation4 + $0x268] sm:$0xff]
    %v876 = vld [vmem:[#allocation4 + $0x270] sm:$0xff]
    %v877 = vld [vmem:[#allocation4 + $0x278] sm:$0xff]
    %v878 = vld [vmem:[#allocation4 + $0x280] sm:$0xff]
    %v879 = vld [vmem:[#allocation4 + $0x288] sm:$0xff]
    %v880 = vld [vmem:[#allocation4 + $0x290] sm:$0xff]
    %v881 = vld [vmem:[#allocation4 + $0x298] sm:$0xff]
    %v882 = vld [vmem:[#allocation4 + $0x2a0] sm:$0xff]
    %v883 = vld [vmem:[#allocation4 + $0x2a8] sm:$0xff]
    %v884 = vld [vmem:[#allocation4 + $0x2b0] sm:$0xff]
    %v885 = vld [vmem:[#allocation4 + $0x2b8] sm:$0xff]
    %v886 = vld [vmem:[#allocation4 + $0x2c0] sm:$0xff]
    %v887 = vld [vmem:[#allocation4 + $0x2c8] sm:$0xff]
    %v888 = vld [vmem:[#allocation4 + $0x2d0] sm:$0xff]
    %v889 = vld [vmem:[#allocation4 + $0x2d8] sm:$0xff]
    %v890 = vld [vmem:[#allocation4 + $0x2e0] sm:$0xff]
    %v891 = vld [vmem:[#allocation4 + $0x2e8] sm:$0xff]
    %v892 = vld [vmem:[#allocation4 + $0x2f0] sm:$0xff]
    %v893 = vld [vmem:[#allocation4 + $0x2f8] sm:$0xff]
    %v894 = vld [vmem:[#allocation4 + $0x300] sm:$0xff]
    %v895 = vld [vmem:[#allocation4 + $0x308] sm:$0xff]
    %v896 = vld [vmem:[#allocation4 + $0x310] sm:$0xff]
    %v897 = vld [vmem:[#allocation4 + $0x318] sm:$0xff]
    %v898 = vld [vmem:[#allocation4 + $0x320] sm:$0xff]
    %v899 = vld [vmem:[#allocation4 + $0x328] sm:$0xff]
    %v900 = vld [vmem:[#allocation4 + $0x330] sm:$0xff]
    %v901 = vld [vmem:[#allocation4 + $0x338] sm:$0xff]
    %v902 = vld [vmem:[#allocation4 + $0x340] sm:$0xff]
    %v903 = vld [vmem:[#allocation4 + $0x348] sm:$0xff]
    %v904 = vld [vmem:[#allocation4 + $0x350] sm:$0xff]
    %v905 = vld [vmem:[#allocation4 + $0x358] sm:$0xff]
    %v906 = vld [vmem:[#allocation4 + $0x360] sm:$0xff]
    %v907 = vld [vmem:[#allocation4 + $0x368] sm:$0xff]
    %v908 = vld [vmem:[#allocation4 + $0x370] sm:$0xff]
    %v909 = vld [vmem:[#allocation4 + $0x378] sm:$0xff]
    %v910 = vld [vmem:[#allocation4 + $0x380] sm:$0xff]
    %v911 = vld [vmem:[#allocation4 + $0x388] sm:$0xff]
    %v912 = vld [vmem:[#allocation4 + $0x390] sm:$0xff]
    %v913 = vld [vmem:[#allocation4 + $0x398] sm:$0xff]
    %v914 = vld [vmem:[#allocation4 + $0x3a0] sm:$0xff]
    %v915 = vld [vmem:[#allocation4 + $0x3a8] sm:$0xff]
    %v916 = vld [vmem:[#allocation4 + $0x3b0] sm:$0xff]
    %v917 = vld [vmem:[#allocation4 + $0x3b8] sm:$0xff]
    %v918 = vld [vmem:[#allocation4 + $0x3c0] sm:$0xff]
    %v919 = vld [vmem:[#allocation4 + $0x3c8] sm:$0xff]
    %v920 = vld [vmem:[#allocation4 + $0x3d0] sm:$0xff]
    %v921 = vld [vmem:[#allocation4 + $0x3d8] sm:$0xff]
    %v922 = vld [vmem:[#allocation4 + $0x3e0] sm:$0xff]
    %v923 = vld [vmem:[#allocation4 + $0x3e8] sm:$0xff]
    %v924 = vld [vmem:[#allocation4 + $0x3f0] sm:$0xff]
    %v925 = vld [vmem:[#allocation4 + $0x3f8] sm:$0xff]
    %v926 = vld [vmem:[#allocation4 + $0x400] sm:$0xff]
    %v927 = vld [vmem:[#allocation4 + $0x408] sm:$0xff]
    %v928 = vld [vmem:[#allocation4 + $0x410] sm:$0xff]
    %v929 = vld [vmem:[#allocation4 + $0x418] sm:$0xff]
    %v930 = vld [vmem:[#allocation4 + $0x420] sm:$0xff]
    %v931 = vld [vmem:[#allocation4 + $0x428] sm:$0xff]
    %v932 = vld [vmem:[#allocation4 + $0x430] sm:$0xff]
    %v933 = vld [vmem:[#allocation4 + $0x438] sm:$0xff]
    %v934 = vld [vmem:[#allocation4 + $0x440] sm:$0xff]
    %v935 = vld [vmem:[#allocation4 + $0x448] sm:$0xff]
    %v936 = vld [vmem:[#allocation4 + $0x450] sm:$0xff]
    %v937 = vld [vmem:[#allocation4 + $0x458] sm:$0xff]
    %v938 = vld [vmem:[#allocation4 + $0x460] sm:$0xff]
    %v939 = vld [vmem:[#allocation4 + $0x468] sm:$0xff]
    %v940 = vld [vmem:[#allocation4 + $0x470] sm:$0xff]
    %v941 = vld [vmem:[#allocation4 + $0x478] sm:$0xff]
    %v942 = vld [vmem:[#allocation4 + $0x480] sm:$0xff]
    %v943 = vld [vmem:[#allocation4 + $0x488] sm:$0xff]
    %v944 = vld [vmem:[#allocation4 + $0x490] sm:$0xff]
    %v945 = vld [vmem:[#allocation4 + $0x498] sm:$0xff]
    %v946 = vld [vmem:[#allocation4 + $0x4a0] sm:$0xff]
    %v947 = vld [vmem:[#allocation4 + $0x4a8] sm:$0xff]
    %v948 = vld [vmem:[#allocation4 + $0x4b0] sm:$0xff]
    %v949 = vld [vmem:[#allocation4 + $0x4b8] sm:$0xff]
    %v950 = vld [vmem:[#allocation4 + $0x4c0] sm:$0xff]
    %v951 = vld [vmem:[#allocation4 + $0x4c8] sm:$0xff]
    %v952 = vld [vmem:[#allocation4 + $0x4d0] sm:$0xff]
    %v953 = vld [vmem:[#allocation4 + $0x4d8] sm:$0xff]
    %v954 = vld [vmem:[#allocation4 + $0x4e0] sm:$0xff]
    %v955 = vld [vmem:[#allocation4 + $0x4e8] sm:$0xff]
    %v956 = vld [vmem:[#allocation4 + $0x4f0] sm:$0xff]
    %v957 = vld [vmem:[#allocation4 + $0x4f8] sm:$0xff]
    %v958 = vld [vmem:[#allocation4 + $0x500] sm:$0xff]
    %v959 = vld [vmem:[#allocation4 + $0x508] sm:$0xff]
    %v960 = vld [vmem:[#allocation4 + $0x510] sm:$0xff]
    %v961 = vld [vmem:[#allocation4 + $0x518] sm:$0xff]
    %v962 = vld [vmem:[#allocation4 + $0x520] sm:$0xff]
    %v963 = vld [vmem:[#allocation4 + $0x528] sm:$0xff]
    %v964 = vld [vmem:[#allocation4 + $0x530] sm:$0xff]
    %v965 = vld [vmem:[#allocation4 + $0x538] sm:$0xff]
    %v966 = vld [vmem:[#allocation4 + $0x540] sm:$0xff]
    %v967 = vld [vmem:[#allocation4 + $0x548] sm:$0xff]
    %v968 = vld [vmem:[#allocation4 + $0x550] sm:$0xff]
    %v969 = vld [vmem:[#allocation4 + $0x558] sm:$0xff]
    %v970 = vld [vmem:[#allocation4 + $0x560] sm:$0xff]
    %v971 = vld [vmem:[#allocation4 + $0x568] sm:$0xff]
    %v972 = vld [vmem:[#allocation4 + $0x570] sm:$0xff]
    %v973 = vld [vmem:[#allocation4 + $0x578] sm:$0xff]
    %v974 = vld [vmem:[#allocation4 + $0x580] sm:$0xff]
    %v975 = vld [vmem:[#allocation4 + $0x588] sm:$0xff]
    %v976 = vld [vmem:[#allocation4 + $0x590] sm:$0xff]
    %v977 = vld [vmem:[#allocation4 + $0x598] sm:$0xff]
    %v978 = vld [vmem:[#allocation4 + $0x5a0] sm:$0xff]
    %v979 = vld [vmem:[#allocation4 + $0x5a8] sm:$0xff]
    %v980 = vld [vmem:[#allocation4 + $0x5b0] sm:$0xff]
    %v981 = vld [vmem:[#allocation4 + $0x5b8] sm:$0xff]
    %v982 = vld [vmem:[#allocation4 + $0x5c0] sm:$0xff]
    %v983 = vld [vmem:[#allocation4 + $0x5c8] sm:$0xff]
    %v984 = vld [vmem:[#allocation4 + $0x5d0] sm:$0xff]
    %v985 = vld [vmem:[#allocation4 + $0x5d8] sm:$0xff]
    %v986 = vld [vmem:[#allocation4 + $0x5e0] sm:$0xff]
    %v987 = vld [vmem:[#allocation4 + $0x5e8] sm:$0xff]
    %v988 = vld [vmem:[#allocation4 + $0x5f0] sm:$0xff]
    %v989 = vld [vmem:[#allocation4 + $0x5f8] sm:$0xff]
    %v990 = vld [vmem:[#allocation4 + $0x600] sm:$0xff]
    %v991 = vld [vmem:[#allocation4 + $0x608] sm:$0xff]
    %v992 = vld [vmem:[#allocation4 + $0x610] sm:$0xff]
    %v993 = vld [vmem:[#allocation4 + $0x618] sm:$0xff]
    %v994 = vld [vmem:[#allocation4 + $0x620] sm:$0xff]
    %v995 = vld [vmem:[#allocation4 + $0x628] sm:$0xff]
    %v996 = vld [vmem:[#allocation4 + $0x630] sm:$0xff]
    %v997 = vld [vmem:[#allocation4 + $0x638] sm:$0xff]
    %v998 = vld [vmem:[#allocation4 + $0x640] sm:$0xff]
    %v999 = vld [vmem:[#allocation4 + $0x648] sm:$0xff]
    %v1000 = vld [vmem:[#allocation4 + $0x650] sm:$0xff]
    %v1001 = vld [vmem:[#allocation4 + $0x658] sm:$0xff]
    %v1002 = vld [vmem:[#allocation4 + $0x660] sm:$0xff]
    %v1003 = vld [vmem:[#allocation4 + $0x668] sm:$0xff]
    %v1004 = vld [vmem:[#allocation4 + $0x670] sm:$0xff]
    %v1005 = vld [vmem:[#allocation4 + $0x678] sm:$0xff]
    %v1006 = vld [vmem:[#allocation4 + $0x680] sm:$0xff]
    %v1007 = vld [vmem:[#allocation4 + $0x688] sm:$0xff]
    %v1008 = vld [vmem:[#allocation4 + $0x690] sm:$0xff]
    %v1009 = vld [vmem:[#allocation4 + $0x698] sm:$0xff]
    %v1010 = vld [vmem:[#allocation4 + $0x6a0] sm:$0xff]
    %v1011 = vld [vmem:[#allocation4 + $0x6a8] sm:$0xff]
    %v1012 = vld [vmem:[#allocation4 + $0x6b0] sm:$0xff]
    %v1013 = vld [vmem:[#allocation4 + $0x6b8] sm:$0xff]
    %v1014 = vld [vmem:[#allocation4 + $0x6c0] sm:$0xff]
    %v1015 = vld [vmem:[#allocation4 + $0x6c8] sm:$0xff]
    %v1016 = vld [vmem:[#allocation4 + $0x6d0] sm:$0xff]
    %v1017 = vld [vmem:[#allocation4 + $0x6d8] sm:$0xff]
    %v1018 = vld [vmem:[#allocation4 + $0x6e0] sm:$0xff]
    %v1019 = vld [vmem:[#allocation4 + $0x6e8] sm:$0xff]
    %v1020 = vld [vmem:[#allocation4 + $0x6f0] sm:$0xff]
    %v1021 = vld [vmem:[#allocation4 + $0x6f8] sm:$0xff]
    %v1022 = vld [vmem:[#allocation4 + $0x700] sm:$0xff]
    %v1023 = vld [vmem:[#allocation4 + $0x708] sm:$0xff]
    %v1024 = vld [vmem:[#allocation4 + $0x710] sm:$0xff]
    %v1025 = vld [vmem:[#allocation4 + $0x718] sm:$0xff]
    %v1026 = vld [vmem:[#allocation4 + $0x720] sm:$0xff]
    %v1027 = vld [vmem:[#allocation4 + $0x728] sm:$0xff]
    %v1028 = vld [vmem:[#allocation4 + $0x730] sm:$0xff]
    %v1029 = vld [vmem:[#allocation4 + $0x738] sm:$0xff]
    %v1030 = vld [vmem:[#allocation4 + $0x740] sm:$0xff]
    %v1031 = vld [vmem:[#allocation4 + $0x748] sm:$0xff]
    %v1032 = vld [vmem:[#allocation4 + $0x750] sm:$0xff]
    %v1033 = vld [vmem:[#allocation4 + $0x758] sm:$0xff]
    %v1034 = vld [vmem:[#allocation4 + $0x760] sm:$0xff]
    %v1035 = vld [vmem:[#allocation4 + $0x768] sm:$0xff]
    %v1036 = vld [vmem:[#allocation4 + $0x770] sm:$0xff]
    %v1037 = vld [vmem:[#allocation4 + $0x778] sm:$0xff]
    %v1038 = vld [vmem:[#allocation4 + $0x780] sm:$0xff]
    %v1039 = vld [vmem:[#allocation4 + $0x788] sm:$0xff]
    %v1040 = vld [vmem:[#allocation4 + $0x790] sm:$0xff]
    %v1041 = vld [vmem:[#allocation4 + $0x798] sm:$0xff]
    %v1042 = vld [vmem:[#allocation4 + $0x7a0] sm:$0xff]
    %v1043 = vld [vmem:[#allocation4 + $0x7a8] sm:$0xff]
    %v1044 = vld [vmem:[#allocation4 + $0x7b0] sm:$0xff]
    %v1045 = vld [vmem:[#allocation4 + $0x7b8] sm:$0xff]
    %v1046 = vld [vmem:[#allocation4 + $0x7c0] sm:$0xff]
    %v1047 = vld [vmem:[#allocation4 + $0x7c8] sm:$0xff]
    %v1048 = vld [vmem:[#allocation4 + $0x7d0] sm:$0xff]
    %v1049 = vld [vmem:[#allocation4 + $0x7d8] sm:$0xff]
    %v1050 = vld [vmem:[#allocation4 + $0x7e0] sm:$0xff]
    %v1051 = vld [vmem:[#allocation4 + $0x7e8] sm:$0xff]
    %v1052 = vld [vmem:[#allocation4 + $0x7f0] sm:$0xff]
    %v1053 = vld [vmem:[#allocation4 + $0x7f8] sm:$0xff]
    %v1054 = vpack.c.bf16 %v790, %v790
    %v1055 = vpack.c.bf16 %v791, %v791
    %v1056 = vpack.c.bf16 %v792, %v792
    %v1057 = vpack.c.bf16 %v793, %v793
    %1058 = vmatprep.subr.bf16.mxu0 %v799
    %1059 = vmatpush1.bf16.msra.mxu0 %v798
    %1060 = vmatprep.subr.bf16.mxu0 %v807
    %1061 = vmatpush1.bf16.msra.mxu0 %v806
    %1062 = vmatprep.subr.bf16.mxu0 %v815
    %1063 = vmatpush1.bf16.msra.mxu0 %v814
    %1064 = vmatprep.subr.bf16.mxu0 %v823
    %1065 = vmatpush1.bf16.msra.mxu0 %v822
    %1066 = vmatprep.subr.bf16.mxu0 %v831
    %1067 = vmatpush1.bf16.msra.mxu0 %v830
    %1068 = vmatprep.subr.bf16.mxu0 %v839
    %1069 = vmatpush1.bf16.msra.mxu0 %v838
    %1070 = vmatprep.subr.bf16.mxu0 %v847
    %1071 = vmatpush1.bf16.msra.mxu0 %v846
    %1072 = vmatprep.subr.bf16.mxu0 %v855
    %1073 = vmatpush1.bf16.msra.mxu0 %v854
    %1074 = vmatprep.subr.bf16.mxu0 %v863
    %1075 = vmatpush1.bf16.msra.mxu0 %v862
    %1076 = vmatprep.subr.bf16.mxu0 %v871
    %1077 = vmatpush1.bf16.msra.mxu0 %v870
    %1078 = vmatprep.subr.bf16.mxu0 %v879
    %1079 = vmatpush1.bf16.msra.mxu0 %v878
    %1080 = vmatprep.subr.bf16.mxu0 %v887
    %1081 = vmatpush1.bf16.msra.mxu0 %v886
    %1082 = vmatprep.subr.bf16.mxu0 %v895
    %1083 = vmatpush1.bf16.msra.mxu0 %v894
    %1084 = vmatprep.subr.bf16.mxu0 %v903
    %1085 = vmatpush1.bf16.msra.mxu0 %v902
    %1086 = vmatprep.subr.bf16.mxu0 %v911
    %1087 = vmatpush1.bf16.msra.mxu0 %v910
    %1088 = vmatprep.subr.bf16.mxu0 %v919
    %1089 = vmatpush1.bf16.msra.mxu0 %v918
    %1090 = vmatprep.mubr.bf16.mxu0 %v1055
    %1091 = vmatmul.mubr.bf16.gmra.mrb[0].mxu0 %v1054
    %v1092 = vpop.f32.mrb[0].mxu0
    %v1093 = vadd.f32 0.0, %v1092
    %v1094 = vpop.f32.mrb[0].mxu0
    %v1095 = vadd.f32 0.0, %v1094
    %v1096 = vpop.f32.mrb[0].mxu0
    %v1097 = vpop.f32.mrb[0].mxu0
    %1098 = vdwg.mxu0
    %1099 = vmatprep.subr.bf16.mxu0 %v927
    %1100 = vmatpush1.bf16.msra.mxu0 %v926
    %1101 = vmatprep.subr.bf16.mxu0 %v935
    %1102 = vmatpush1.bf16.msra.mxu0 %v934
    %1103 = vmatprep.subr.bf16.mxu0 %v943
    %1104 = vmatpush1.bf16.msra.mxu0 %v942
    %1105 = vmatprep.subr.bf16.mxu0 %v951
    %1106 = vmatpush1.bf16.msra.mxu0 %v950
    %1107 = vmatprep.subr.bf16.mxu0 %v959
    %1108 = vmatpush1.bf16.msra.mxu0 %v958
    %1109 = vmatprep.subr.bf16.mxu0 %v967
    %1110 = vmatpush1.bf16.msra.mxu0 %v966
    %1111 = vmatprep.subr.bf16.mxu0 %v975
    %1112 = vmatpush1.bf16.msra.mxu0 %v974
    %1113 = vmatprep.subr.bf16.mxu0 %v983
    %1114 = vmatpush1.bf16.msra.mxu0 %v982
    %1115 = vmatprep.subr.bf16.mxu0 %v991
    %1116 = vmatpush1.bf16.msra.mxu0 %v990
    %1117 = vmatprep.subr.bf16.mxu0 %v999
    %1118 = vmatpush1.bf16.msra.mxu0 %v998
    %1119 = vmatprep.subr.bf16.mxu0 %v1007
    %1120 = vmatpush1.bf16.msra.mxu0 %v1006
    %1121 = vmatprep.subr.bf16.mxu0 %v1015
    %1122 = vmatpush1.bf16.msra.mxu0 %v1014
    %1123 = vmatprep.subr.bf16.mxu0 %v1023
    %1124 = vmatpush1.bf16.msra.mxu0 %v1022
    %1125 = vmatprep.subr.bf16.mxu0 %v1031
    %1126 = vmatpush1.bf16.msra.mxu0 %v1030
    %1127 = vmatprep.subr.bf16.mxu0 %v1039
    %1128 = vmatpush1.bf16.msra.mxu0 %v1038
    %1129 = vmatprep.subr.bf16.mxu0 %v1047
    %1130 = vmatpush1.bf16.msra.mxu0 %v1046
    %1131 = vmatprep.mubr.bf16.mxu0 %v1057
    %1132 = vmatmul.mubr.bf16.gmra.mrb[0].mxu0 %v1056
    %v1133 = vpop.f32.mrb[0].mxu0
    %v1134 = vadd.f32 %v1093, %v1133
    %v1135 = vpop.f32.mrb[0].mxu0
    %v1136 = vadd.f32 %v1095, %v1135
    %v1137 = vpop.f32.mrb[0].mxu0
    %v1138 = vpop.f32.mrb[0].mxu0
    %1139 = vdwg.mxu0
    %1140 = vmatprep.subr.bf16.mxu0 %v801
    %1141 = vmatpush1.bf16.msra.mxu0 %v800
    %1142 = vmatprep.subr.bf16.mxu0 %v809
    %1143 = vmatpush1.bf16.msra.mxu0 %v808
    %1144 = vmatprep.subr.bf16.mxu0 %v817
    %1145 = vmatpush1.bf16.msra.mxu0 %v816
    %1146 = vmatprep.subr.bf16.mxu0 %v825
    %1147 = vmatpush1.bf16.msra.mxu0 %v824
    %1148 = vmatprep.subr.bf16.mxu0 %v833
    %1149 = vmatpush1.bf16.msra.mxu0 %v832
    %1150 = vmatprep.subr.bf16.mxu0 %v841
    %1151 = vmatpush1.bf16.msra.mxu0 %v840
    %1152 = vmatprep.subr.bf16.mxu0 %v849
    %1153 = vmatpush1.bf16.msra.mxu0 %v848
    %1154 = vmatprep.subr.bf16.mxu0 %v857
    %1155 = vmatpush1.bf16.msra.mxu0 %v856
    %1156 = vmatprep.subr.bf16.mxu0 %v865
    %1157 = vmatpush1.bf16.msra.mxu0 %v864
    %1158 = vmatprep.subr.bf16.mxu0 %v873
    %1159 = vmatpush1.bf16.msra.mxu0 %v872
    %1160 = vmatprep.subr.bf16.mxu0 %v881
    %1161 = vmatpush1.bf16.msra.mxu0 %v880
    %1162 = vmatprep.subr.bf16.mxu0 %v889
    %1163 = vmatpush1.bf16.msra.mxu0 %v888
    %1164 = vmatprep.subr.bf16.mxu0 %v897
    %1165 = vmatpush1.bf16.msra.mxu0 %v896
    %1166 = vmatprep.subr.bf16.mxu0 %v905
    %1167 = vmatpush1.bf16.msra.mxu0 %v904
    %1168 = vmatprep.subr.bf16.mxu0 %v913
    %1169 = vmatpush1.bf16.msra.mxu0 %v912
    %1170 = vmatprep.subr.bf16.mxu0 %v921
    %1171 = vmatpush1.bf16.msra.mxu0 %v920
    %1172 = vmatprep.mubr.bf16.mxu0 %v1055
    %1173 = vmatmul.mubr.bf16.gmra.mrb[0].mxu0 %v1054
    %v1174 = vpop.f32.mrb[0].mxu0
    %v1175 = vadd.f32 0.0, %v1174
    %v1176 = vpop.f32.mrb[0].mxu0
    %v1177 = vadd.f32 0.0, %v1176
    %v1178 = vpop.f32.mrb[0].mxu0
    %v1179 = vpop.f32.mrb[0].mxu0
    %1180 = vdwg.mxu0
    %1181 = vmatprep.subr.bf16.mxu0 %v929
    %1182 = vmatpush1.bf16.msra.mxu0 %v928
    %1183 = vmatprep.subr.bf16.mxu0 %v937
    %1184 = vmatpush1.bf16.msra.mxu0 %v936
    %1185 = vmatprep.subr.bf16.mxu0 %v945
    %1186 = vmatpush1.bf16.msra.mxu0 %v944
    %1187 = vmatprep.subr.bf16.mxu0 %v953
    %1188 = vmatpush1.bf16.msra.mxu0 %v952
    %1189 = vmatprep.subr.bf16.mxu0 %v961
    %1190 = vmatpush1.bf16.msra.mxu0 %v960
    %1191 = vmatprep.subr.bf16.mxu0 %v969
    %1192 = vmatpush1.bf16.msra.mxu0 %v968
    %1193 = vmatprep.subr.bf16.mxu0 %v977
    %1194 = vmatpush1.bf16.msra.mxu0 %v976
    %1195 = vmatprep.subr.bf16.mxu0 %v985
    %1196 = vmatpush1.bf16.msra.mxu0 %v984
    %1197 = vmatprep.subr.bf16.mxu0 %v993
    %1198 = vmatpush1.bf16.msra.mxu0 %v992
    %1199 = vmatprep.subr.bf16.mxu0 %v1001
    %1200 = vmatpush1.bf16.msra.mxu0 %v1000
    %1201 = vmatprep.subr.bf16.mxu0 %v1009
    %1202 = vmatpush1.bf16.msra.mxu0 %v1008
    %1203 = vmatprep.subr.bf16.mxu0 %v1017
    %1204 = vmatpush1.bf16.msra.mxu0 %v1016
    %1205 = vmatprep.subr.bf16.mxu0 %v1025
    %1206 = vmatpush1.bf16.msra.mxu0 %v1024
    %1207 = vmatprep.subr.bf16.mxu0 %v1033
    %1208 = vmatpush1.bf16.msra.mxu0 %v1032
    %1209 = vmatprep.subr.bf16.mxu0 %v1041
    %1210 = vmatpush1.bf16.msra.mxu0 %v1040
    %1211 = vmatprep.subr.bf16.mxu0 %v1049
    %1212 = vmatpush1.bf16.msra.mxu0 %v1048
    %1213 = vmatprep.mubr.bf16.mxu0 %v1057
    %1214 = vmatmul.mubr.bf16.gmra.mrb[0].mxu0 %v1056
    %v1215 = vpop.f32.mrb[0].mxu0
    %v1216 = vadd.f32 %v1175, %v1215
    %v1217 = vpop.f32.mrb[0].mxu0
    %v1218 = vadd.f32 %v1177, %v1217
    %v1219 = vpop.f32.mrb[0].mxu0
    %v1220 = vpop.f32.mrb[0].mxu0
    %1221 = vdwg.mxu0
    %1222 = vmatprep.subr.bf16.mxu0 %v803
    %1223 = vmatpush1.bf16.msra.mxu0 %v802
    %1224 = vmatprep.subr.bf16.mxu0 %v811
    %1225 = vmatpush1.bf16.msra.mxu0 %v810
    %1226 = vmatprep.subr.bf16.mxu0 %v819
    %1227 = vmatpush1.bf16.msra.mxu0 %v818
    %1228 = vmatprep.subr.bf16.mxu0 %v827
    %1229 = vmatpush1.bf16.msra.mxu0 %v826
    %1230 = vmatprep.subr.bf16.mxu0 %v835
    %1231 = vmatpush1.bf16.msra.mxu0 %v834
    %1232 = vmatprep.subr.bf16.mxu0 %v843
    %1233 = vmatpush1.bf16.msra.mxu0 %v842
    %1234 = vmatprep.subr.bf16.mxu0 %v851
    %1235 = vmatpush1.bf16.msra.mxu0 %v850
    %1236 = vmatprep.subr.bf16.mxu0 %v859
    %1237 = vmatpush1.bf16.msra.mxu0 %v858
    %1238 = vmatprep.subr.bf16.mxu0 %v867
    %1239 = vmatpush1.bf16.msra.mxu0 %v866
    %1240 = vmatprep.subr.bf16.mxu0 %v875
    %1241 = vmatpush1.bf16.msra.mxu0 %v874
    %1242 = vmatprep.subr.bf16.mxu0 %v883
    %1243 = vmatpush1.bf16.msra.mxu0 %v882
    %1244 = vmatprep.subr.bf16.mxu0 %v891
    %1245 = vmatpush1.bf16.msra.mxu0 %v890
    %1246 = vmatprep.subr.bf16.mxu0 %v899
    %1247 = vmatpush1.bf16.msra.mxu0 %v898
    %1248 = vmatprep.subr.bf16.mxu0 %v907
    %1249 = vmatpush1.bf16.msra.mxu0 %v906
    %1250 = vmatprep.subr.bf16.mxu0 %v915
    %1251 = vmatpush1.bf16.msra.mxu0 %v914
    %1252 = vmatprep.subr.bf16.mxu0 %v923
    %1253 = vmatpush1.bf16.msra.mxu0 %v922
    %1254 = vmatprep.mubr.bf16.mxu0 %v1055
    %1255 = vmatmul.mubr.bf16.gmra.mrb[0].mxu0 %v1054
    %v1256 = vpop.f32.mrb[0].mxu0
    %v1257 = vadd.f32 0.0, %v1256
    %v1258 = vpop.f32.mrb[0].mxu0
    %v1259 = vadd.f32 0.0, %v1258
    %v1260 = vpop.f32.mrb[0].mxu0
    %v1261 = vpop.f32.mrb[0].mxu0
    %1262 = vdwg.mxu0
    %1263 = vmatprep.subr.bf16.mxu0 %v931
    %1264 = vmatpush1.bf16.msra.mxu0 %v930
    %1265 = vmatprep.subr.bf16.mxu0 %v939
    %1266 = vmatpush1.bf16.msra.mxu0 %v938
    %1267 = vmatprep.subr.bf16.mxu0 %v947
    %1268 = vmatpush1.bf16.msra.mxu0 %v946
    %1269 = vmatprep.subr.bf16.mxu0 %v955
    %1270 = vmatpush1.bf16.msra.mxu0 %v954
    %1271 = vmatprep.subr.bf16.mxu0 %v963
    %1272 = vmatpush1.bf16.msra.mxu0 %v962
    %1273 = vmatprep.subr.bf16.mxu0 %v971
    %1274 = vmatpush1.bf16.msra.mxu0 %v970
    %1275 = vmatprep.subr.bf16.mxu0 %v979
    %1276 = vmatpush1.bf16.msra.mxu0 %v978
    %1277 = vmatprep.subr.bf16.mxu0 %v987
    %1278 = vmatpush1.bf16.msra.mxu0 %v986
    %1279 = vmatprep.subr.bf16.mxu0 %v995
    %1280 = vmatpush1.bf16.msra.mxu0 %v994
    %1281 = vmatprep.subr.bf16.mxu0 %v1003
    %1282 = vmatpush1.bf16.msra.mxu0 %v1002
    %1283 = vmatprep.subr.bf16.mxu0 %v1011
    %1284 = vmatpush1.bf16.msra.mxu0 %v1010
    %1285 = vmatprep.subr.bf16.mxu0 %v1019
    %1286 = vmatpush1.bf16.msra.mxu0 %v1018
    %1287 = vmatprep.subr.bf16.mxu0 %v1027
    %1288 = vmatpush1.bf16.msra.mxu0 %v1026
    %1289 = vmatprep.subr.bf16.mxu0 %v1035
    %1290 = vmatpush1.bf16.msra.mxu0 %v1034
    %1291 = vmatprep.subr.bf16.mxu0 %v1043
    %1292 = vmatpush1.bf16.msra.mxu0 %v1042
    %1293 = vmatprep.subr.bf16.mxu0 %v1051
    %1294 = vmatpush1.bf16.msra.mxu0 %v1050
    %1295 = vmatprep.mubr.bf16.mxu0 %v1057
    %1296 = vmatmul.mubr.bf16.gmra.mrb[0].mxu0 %v1056
    %v1297 = vpop.f32.mrb[0].mxu0
    %v1298 = vadd.f32 %v1257, %v1297
    %v1299 = vpop.f32.mrb[0].mxu0
    %v1300 = vadd.f32 %v1259, %v1299
    %v1301 = vpop.f32.mrb[0].mxu0
    %v1302 = vpop.f32.mrb[0].mxu0
    %1303 = vdwg.mxu0
    %1304 = vmatprep.subr.bf16.mxu0 %v805
    %1305 = vmatpush1.bf16.msra.mxu0 %v804
    %1306 = vmatprep.subr.bf16.mxu0 %v813
    %1307 = vmatpush1.bf16.msra.mxu0 %v812
    %1308 = vmatprep.subr.bf16.mxu0 %v821
    %1309 = vmatpush1.bf16.msra.mxu0 %v820
    %1310 = vmatprep.subr.bf16.mxu0 %v829
    %1311 = vmatpush1.bf16.msra.mxu0 %v828
    %1312 = vmatprep.subr.bf16.mxu0 %v837
    %1313 = vmatpush1.bf16.msra.mxu0 %v836
    %1314 = vmatprep.subr.bf16.mxu0 %v845
    %1315 = vmatpush1.bf16.msra.mxu0 %v844
    %1316 = vmatprep.subr.bf16.mxu0 %v853
    %1317 = vmatpush1.bf16.msra.mxu0 %v852
    %1318 = vmatprep.subr.bf16.mxu0 %v861
    %1319 = vmatpush1.bf16.msra.mxu0 %v860
    %1320 = vmatprep.subr.bf16.mxu0 %v869
    %1321 = vmatpush1.bf16.msra.mxu0 %v868
    %1322 = vmatprep.subr.bf16.mxu0 %v877
    %1323 = vmatpush1.bf16.msra.mxu0 %v876
    %1324 = vmatprep.subr.bf16.mxu0 %v885
    %1325 = vmatpush1.bf16.msra.mxu0 %v884
    %1326 = vmatprep.subr.bf16.mxu0 %v893
    %1327 = vmatpush1.bf16.msra.mxu0 %v892
    %1328 = vmatprep.subr.bf16.mxu0 %v901
    %1329 = vmatpush1.bf16.msra.mxu0 %v900
    %1330 = vmatprep.subr.bf16.mxu0 %v909
    %1331 = vmatpush1.bf16.msra.mxu0 %v908
    %1332 = vmatprep.subr.bf16.mxu0 %v917
    %1333 = vmatpush1.bf16.msra.mxu0 %v916
    %1334 = vmatprep.subr.bf16.mxu0 %v925
    %1335 = vmatpush1.bf16.msra.mxu0 %v924
    %1336 = vmatprep.mubr.bf16.mxu0 %v1055
    %1337 = vmatmul.mubr.bf16.gmra.mrb[0].mxu0 %v1054
    %v1338 = vpop.f32.mrb[0].mxu0
    %v1339 = vadd.f32 0.0, %v1338
    %v1340 = vpop.f32.mrb[0].mxu0
    %v1341 = vadd.f32 0.0, %v1340
    %v1342 = vpop.f32.mrb[0].mxu0
    %v1343 = vpop.f32.mrb[0].mxu0
    %1344 = vdwg.mxu0
    %1345 = vmatprep.subr.bf16.mxu0 %v933
    %1346 = vmatpush1.bf16.msra.mxu0 %v932
    %1347 = vmatprep.subr.bf16.mxu0 %v941
    %1348 = vmatpush1.bf16.msra.mxu0 %v940
    %1349 = vmatprep.subr.bf16.mxu0 %v949
    %1350 = vmatpush1.bf16.msra.mxu0 %v948
    %1351 = vmatprep.subr.bf16.mxu0 %v957
    %1352 = vmatpush1.bf16.msra.mxu0 %v956
    %1353 = vmatprep.subr.bf16.mxu0 %v965
    %1354 = vmatpush1.bf16.msra.mxu0 %v964
    %1355 = vmatprep.subr.bf16.mxu0 %v973
    %1356 = vmatpush1.bf16.msra.mxu0 %v972
    %1357 = vmatprep.subr.bf16.mxu0 %v981
    %1358 = vmatpush1.bf16.msra.mxu0 %v980
    %1359 = vmatprep.subr.bf16.mxu0 %v989
    %1360 = vmatpush1.bf16.msra.mxu0 %v988
    %1361 = vmatprep.subr.bf16.mxu0 %v997
    %1362 = vmatpush1.bf16.msra.mxu0 %v996
    %1363 = vmatprep.subr.bf16.mxu0 %v1005
    %1364 = vmatpush1.bf16.msra.mxu0 %v1004
    %1365 = vmatprep.subr.bf16.mxu0 %v1013
    %1366 = vmatpush1.bf16.msra.mxu0 %v1012
    %1367 = vmatprep.subr.bf16.mxu0 %v1021
    %1368 = vmatpush1.bf16.msra.mxu0 %v1020
    %1369 = vmatprep.subr.bf16.mxu0 %v1029
    %1370 = vmatpush1.bf16.msra.mxu0 %v1028
    %1371 = vmatprep.subr.bf16.mxu0 %v1037
    %1372 = vmatpush1.bf16.msra.mxu0 %v1036
    %1373 = vmatprep.subr.bf16.mxu0 %v1045
    %1374 = vmatpush1.bf16.msra.mxu0 %v1044
    %1375 = vmatprep.subr.bf16.mxu0 %v1053
    %1376 = vmatpush1.bf16.msra.mxu0 %v1052
    %1377 = vmatprep.mubr.bf16.mxu0 %v1057
    %1378 = vmatmul.mubr.bf16.gmra.mrb[0].mxu0 %v1056
    %v1379 = vpop.f32.mrb[0].mxu0
    %v1380 = vadd.f32 %v1339, %v1379
    %v1381 = vpop.f32.mrb[0].mxu0
    %v1382 = vadd.f32 %v1341, %v1381
    %v1383 = vpop.f32.mrb[0].mxu0
    %v1384 = vpop.f32.mrb[0].mxu0
    %1385 = vdwg.mxu0
    %v1386 = vld [vmem:[#allocation12 + $0xd] sm:$0xff]
    %v1387 = vld [vmem:[#allocation12 + $0x15] sm:$0xff]
    %v1388 = vrot.slane %v1134, 4
    %v1389 = vadd.f32 %v1134, %v1388
    %v1390 = vrot.slane %v1389, 2
    %v1391 = vadd.f32 %v1389, %v1390
    %v1392 = vrot.slane %v1391, 1
    %v1393 = vadd.f32 %v1391, %v1392
    %v1394 = vrot.slane %v1136, 4
    %v1395 = vadd.f32 %v1136, %v1394
    %v1396 = vrot.slane %v1395, 2
    %v1397 = vadd.f32 %v1395, %v1396
    %v1398 = vrot.slane %v1397, 1
    %v1399 = vadd.f32 %v1397, %v1398
    %v1400 = vrot.slane %v1216, 4
    %v1401 = vadd.f32 %v1216, %v1400
    %v1402 = vrot.slane %v1401, 2
    %v1403 = vadd.f32 %v1401, %v1402
    %v1404 = vrot.slane %v1403, 1
    %v1405 = vadd.f32 %v1403, %v1404
    %v1406 = vrot.slane %v1218, 4
    %v1407 = vadd.f32 %v1218, %v1406
    %v1408 = vrot.slane %v1407, 2
    %v1409 = vadd.f32 %v1407, %v1408
    %v1410 = vrot.slane %v1409, 1
    %v1411 = vadd.f32 %v1409, %v1410
    %v1412 = vrot.slane %v1298, 4
    %v1413 = vadd.f32 %v1298, %v1412
    %v1414 = vrot.slane %v1413, 2
    %v1415 = vadd.f32 %v1413, %v1414
    %v1416 = vrot.slane %v1415, 1
    %v1417 = vadd.f32 %v1415, %v1416
    %v1418 = vrot.slane %v1300, 4
    %v1419 = vadd.f32 %v1300, %v1418
    %v1420 = vrot.slane %v1419, 2
    %v1421 = vadd.f32 %v1419, %v1420
    %v1422 = vrot.slane %v1421, 1
    %v1423 = vadd.f32 %v1421, %v1422
    %v1424 = vrot.slane %v1380, 4
    %v1425 = vadd.f32 %v1380, %v1424
    %v1426 = vrot.slane %v1425, 2
    %v1427 = vadd.f32 %v1425, %v1426
    %v1428 = vrot.slane %v1427, 1
    %v1429 = vadd.f32 %v1427, %v1428
    %v1430 = vrot.slane %v1382, 4
    %v1431 = vadd.f32 %v1382, %v1430
    %v1432 = vrot.slane %v1431, 2
    %v1433 = vadd.f32 %v1431, %v1432
    %v1434 = vrot.slane %v1433, 1
    %v1435 = vadd.f32 %v1433, %v1434
    %v1436 = vmul.f32 %v1393, %v345
    %v1437 = vmul.f32 %v1399, %v345
    %v1438 = vmul.f32 %v1405, %v345
    %v1439 = vmul.f32 %v1411, %v345
    %v1440 = vmul.f32 %v1417, %v345
    %v1441 = vmul.f32 %v1423, %v345
    %v1442 = vmul.f32 %v1429, %v345
    %v1443 = vmul.f32 %v1435, %v345
    %v1444 = vsub.f32 %v1134, %v1436
    %v1445 = vsub.f32 %v1136, %v1437
    %v1446 = vsub.f32 %v1216, %v1438
    %v1447 = vsub.f32 %v1218, %v1439
    %v1448 = vsub.f32 %v1298, %v1440
    %v1449 = vsub.f32 %v1300, %v1441
    %v1450 = vsub.f32 %v1380, %v1442
    %v1451 = vsub.f32 %v1382, %v1443
    %v1452 = vmul.f32 %v1444, %v1444
    %v1453 = vmul.f32 %v1445, %v1445
    %v1454 = vmul.f32 %v1446, %v1446
    %v1455 = vmul.f32 %v1447, %v1447
    %v1456 = vmul.f32 %v1448, %v1448
    %v1457 = vmul.f32 %v1449, %v1449
    %v1458 = vmul.f32 %v1450, %v1450
    %v1459 = vmul.f32 %v1451, %v1451
    %v1460 = vrot.slane %v1452, 4
    %v1461 = vadd.f32 %v1452, %v1460
    %v1462 = vrot.slane %v1461, 2
    %v1463 = vadd.f32 %v1461, %v1462
    %v1464 = vrot.slane %v1463, 1
    %v1465 = vadd.f32 %v1463, %v1464
    %v1466 = vrot.slane %v1453, 4
    %v1467 = vadd.f32 %v1453, %v1466
    %v1468 = vrot.slane %v1467, 2
    %v1469 = vadd.f32 %v1467, %v1468
    %v1470 = vrot.slane %v1469, 1
    %v1471 = vadd.f32 %v1469, %v1470
    %v1472 = vrot.slane %v1454, 4
    %v1473 = vadd.f32 %v1454, %v1472
    %v1474 = vrot.slane %v1473, 2
    %v1475 = vadd.f32 %v1473, %v1474
    %v1476 = vrot.slane %v1475, 1
    %v1477 = vadd.f32 %v1475, %v1476
    %v1478 = vrot.slane %v1455, 4
    %v1479 = vadd.f32 %v1455, %v1478
    %v1480 = vrot.slane %v1479, 2
    %v1481 = vadd.f32 %v1479, %v1480
    %v1482 = vrot.slane %v1481, 1
    %v1483 = vadd.f32 %v1481, %v1482
    %v1484 = vrot.slane %v1456, 4
    %v1485 = vadd.f32 %v1456, %v1484
    %v1486 = vrot.slane %v1485, 2
    %v1487 = vadd.f32 %v1485, %v1486
    %v1488 = vrot.slane %v1487, 1
    %v1489 = vadd.f32 %v1487, %v1488
    %v1490 = vrot.slane %v1457, 4
    %v1491 = vadd.f32 %v1457, %v1490
    %v1492 = vrot.slane %v1491, 2
    %v1493 = vadd.f32 %v1491, %v1492
    %v1494 = vrot.slane %v1493, 1
    %v1495 = vadd.f32 %v1493, %v1494
    %v1496 = vrot.slane %v1458, 4
    %v1497 = vadd.f32 %v1458, %v1496
    %v1498 = vrot.slane %v1497, 2
    %v1499 = vadd.f32 %v1497, %v1498
    %v1500 = vrot.slane %v1499, 1
    %v1501 = vadd.f32 %v1499, %v1500
    %v1502 = vrot.slane %v1459, 4
    %v1503 = vadd.f32 %v1459, %v1502
    %v1504 = vrot.slane %v1503, 2
    %v1505 = vadd.f32 %v1503, %v1504
    %v1506 = vrot.slane %v1505, 1
    %v1507 = vadd.f32 %v1505, %v1506
    %v1508 = vmul.f32 %v1465, %v345
    %v1509 = vmul.f32 %v1471, %v345
    %v1510 = vmul.f32 %v1477, %v345
    %v1511 = vmul.f32 %v1483, %v345
    %v1512 = vmul.f32 %v1489, %v345
    %v1513 = vmul.f32 %v1495, %v345
    %v1514 = vmul.f32 %v1501, %v345
    %v1515 = vmul.f32 %v1507, %v345
    %v1516 = vadd.f32 %v1508, 0.8
    %v1517 = vadd.f32 %v1509, 0.8
    %v1518 = vadd.f32 %v1510, 0.8
    %v1519 = vadd.f32 %v1511, 0.8
    %v1520 = vadd.f32 %v1512, 0.8
    %v1521 = vadd.f32 %v1513, 0.8
    %v1522 = vadd.f32 %v1514, 0.8
    %v1523 = vadd.f32 %v1515, 0.8
    %v1524 = vrsqrt.pop %v1516
    %v1525 = vrsqrt.pop %v1517
    %v1526 = vrsqrt.pop %v1518
    %v1527 = vrsqrt.pop %v1519
    %v1528 = vrsqrt.pop %v1520
    %v1529 = vrsqrt.pop %v1521
    %v1530 = vrsqrt.pop %v1522
    %v1531 = vrsqrt.pop %v1523
    %v1540 = vcombine.low %v1524, %v1525
    %v1541 = vcombine.low %v1526, %v1527
    %v1542 = vcombine.low %v1528, %v1529
    %v1543 = vcombine.low %v1530, %v1531
    %v1545 = vunpack.c.l.s4 1966171168
    %v1546 = vunpack.c.0.s8 %v1545
    %v1547 = vlaneseq
    %v1548 = vshrl.u32 %v1547, 7
    %v1549 = vsub.s32 %v1546, %v1548
    %v1550 = vrot.slane %v1540, %v1549
    %v1552 = vunpack.c.l.s4 1966171168
    %v1553 = vunpack.c.0.s8 %v1552
    %v1554 = vlaneseq
    %v1555 = vshrl.u32 %v1554, 7
    %v1556 = vsub.s32 %v1553, %v1555
    %v1557 = vrot.slane %v1541, %v1556
    %v1559 = vunpack.c.l.s4 1966171168
    %v1560 = vunpack.c.0.s8 %v1559
    %v1561 = vlaneseq
    %v1562 = vshrl.u32 %v1561, 7
    %v1563 = vsub.s32 %v1560, %v1562
    %v1564 = vrot.slane %v1542, %v1563
    %v1566 = vunpack.c.l.s4 1966171168
    %v1567 = vunpack.c.0.s8 %v1566
    %v1568 = vlaneseq
    %v1569 = vshrl.u32 %v1568, 7
    %v1570 = vsub.s32 %v1567, %v1569
    %v1571 = vrot.slane %v1543, %v1570
    %v1572 = vcombine.low %v1550, %v1557
    %v1573 = vcombine.low %v1564, %v1571
    %v1575 = vunpack.c.l.s4 1966171168
    %v1576 = vunpack.c.0.s8 %v1575
    %v1577 = vlaneseq
    %v1578 = vshrl.u32 %v1577, 7
    %v1579 = vsub.s32 %v1576, %v1578
    %v1580 = vrot.slane %v1572, %v1579
    %v1582 = vunpack.c.l.s4 1966171168
    %v1583 = vunpack.c.0.s8 %v1582
    %v1584 = vlaneseq
    %v1585 = vshrl.u32 %v1584, 7
    %v1586 = vsub.s32 %v1583, %v1585
    %v1587 = vrot.slane %v1573, %v1586
    %v1588 = vcombine.low %v1580, %v1587
    %v1590 = vmul.f32 %v1386, %v1588
    %v1592 = vlaneseq
    %v1593 = vshrl.u32 %v1592, 7
    %v1594 = vsub.s32 0, %v1593
    %v1595 = vrot.slane %v1590, %v1594
    %v1596 = vlaneseq
    %v1597 = vshrl.u32 %v1596, 7
    %v1598 = vsub.s32 1, %v1597
    %v1599 = vrot.slane %v1590, %v1598
    %v1600 = vlaneseq
    %v1601 = vshrl.u32 %v1600, 7
    %v1602 = vsub.s32 2, %v1601
    %v1603 = vrot.slane %v1590, %v1602
    %v1604 = vlaneseq
    %v1605 = vshrl.u32 %v1604, 7
    %v1606 = vsub.s32 3, %v1605
    %v1607 = vrot.slane %v1590, %v1606
    %v1608 = vlaneseq
    %v1609 = vshrl.u32 %v1608, 7
    %v1610 = vsub.s32 4, %v1609
    %v1611 = vrot.slane %v1590, %v1610
    %v1612 = vlaneseq
    %v1613 = vshrl.u32 %v1612, 7
    %v1614 = vsub.s32 5, %v1613
    %v1615 = vrot.slane %v1590, %v1614
    %v1616 = vlaneseq
    %v1617 = vshrl.u32 %v1616, 7
    %v1618 = vsub.s32 6, %v1617
    %v1619 = vrot.slane %v1590, %v1618
    %v1620 = vlaneseq
    %v1621 = vshrl.u32 %v1620, 7
    %v1622 = vsub.s32 7, %v1621
    %v1623 = vrot.slane %v1590, %v1622
    %v1632 = vmul.f32 %v1436, %v1595
    %v1633 = vmul.f32 %v1437, %v1599
    %v1634 = vmul.f32 %v1438, %v1603
    %v1635 = vmul.f32 %v1439, %v1607
    %v1636 = vmul.f32 %v1440, %v1611
    %v1637 = vmul.f32 %v1441, %v1615
    %v1638 = vmul.f32 %v1442, %v1619
    %v1639 = vmul.f32 %v1443, %v1623
    %v1648 = vcombine.low %v1632, %v1633
    %v1649 = vcombine.low %v1634, %v1635
    %v1650 = vcombine.low %v1636, %v1637
    %v1651 = vcombine.low %v1638, %v1639
    %v1653 = vunpack.c.l.s4 1966171168
    %v1654 = vunpack.c.0.s8 %v1653
    %v1655 = vlaneseq
    %v1656 = vshrl.u32 %v1655, 7
    %v1657 = vsub.s32 %v1654, %v1656
    %v1658 = vrot.slane %v1648, %v1657
    %v1660 = vunpack.c.l.s4 1966171168
    %v1661 = vunpack.c.0.s8 %v1660
    %v1662 = vlaneseq
    %v1663 = vshrl.u32 %v1662, 7
    %v1664 = vsub.s32 %v1661, %v1663
    %v1665 = vrot.slane %v1649, %v1664
    %v1667 = vunpack.c.l.s4 1966171168
    %v1668 = vunpack.c.0.s8 %v1667
    %v1669 = vlaneseq
    %v1670 = vshrl.u32 %v1669, 7
    %v1671 = vsub.s32 %v1668, %v1670
    %v1672 = vrot.slane %v1650, %v1671
    %v1674 = vunpack.c.l.s4 1966171168
    %v1675 = vunpack.c.0.s8 %v1674
    %v1676 = vlaneseq
    %v1677 = vshrl.u32 %v1676, 7
    %v1678 = vsub.s32 %v1675, %v1677
    %v1679 = vrot.slane %v1651, %v1678
    %v1680 = vcombine.low %v1658, %v1665
    %v1681 = vcombine.low %v1672, %v1679
    %v1683 = vunpack.c.l.s4 1966171168
    %v1684 = vunpack.c.0.s8 %v1683
    %v1685 = vlaneseq
    %v1686 = vshrl.u32 %v1685, 7
    %v1687 = vsub.s32 %v1684, %v1686
    %v1688 = vrot.slane %v1680, %v1687
    %v1690 = vunpack.c.l.s4 1966171168
    %v1691 = vunpack.c.0.s8 %v1690
    %v1692 = vlaneseq
    %v1693 = vshrl.u32 %v1692, 7
    %v1694 = vsub.s32 %v1691, %v1693
    %v1695 = vrot.slane %v1681, %v1694
    %v1696 = vcombine.low %v1688, %v1695
    %v1698 = vsub.f32 %v1387, %v1696
    %v1699 = vmul.f32 %v1134, %v1595
    %v1700 = vmul.f32 %v1136, %v1599
    %v1701 = vmul.f32 %v1216, %v1603
    %v1702 = vmul.f32 %v1218, %v1607
    %v1703 = vmul.f32 %v1298, %v1611
    %v1704 = vmul.f32 %v1300, %v1615
    %v1705 = vmul.f32 %v1380, %v1619
    %v1706 = vmul.f32 %v1382, %v1623
    %v1708 = vlaneseq
    %v1709 = vshrl.u32 %v1708, 7
    %v1710 = vsub.s32 0, %v1709
    %v1711 = vrot.slane %v1698, %v1710
    %v1712 = vlaneseq
    %v1713 = vshrl.u32 %v1712, 7
    %v1714 = vsub.s32 1, %v1713
    %v1715 = vrot.slane %v1698, %v1714
    %v1716 = vlaneseq
    %v1717 = vshrl.u32 %v1716, 7
    %v1718 = vsub.s32 2, %v1717
    %v1719 = vrot.slane %v1698, %v1718
    %v1720 = vlaneseq
    %v1721 = vshrl.u32 %v1720, 7
    %v1722 = vsub.s32 3, %v1721
    %v1723 = vrot.slane %v1698, %v1722
    %v1724 = vlaneseq
    %v1725 = vshrl.u32 %v1724, 7
    %v1726 = vsub.s32 4, %v1725
    %v1727 = vrot.slane %v1698, %v1726
    %v1728 = vlaneseq
    %v1729 = vshrl.u32 %v1728, 7
    %v1730 = vsub.s32 5, %v1729
    %v1731 = vrot.slane %v1698, %v1730
    %v1732 = vlaneseq
    %v1733 = vshrl.u32 %v1732, 7
    %v1734 = vsub.s32 6, %v1733
    %v1735 = vrot.slane %v1698, %v1734
    %v1736 = vlaneseq
    %v1737 = vshrl.u32 %v1736, 7
    %v1738 = vsub.s32 7, %v1737
    %v1739 = vrot.slane %v1698, %v1738
    %v1748 = vadd.f32 %v1699, %v1711
    %v1749 = vadd.f32 %v1700, %v1715
    %v1750 = vadd.f32 %v1701, %v1719
    %v1751 = vadd.f32 %v1702, %v1723
    %v1752 = vadd.f32 %v1703, %v1727
    %v1753 = vadd.f32 %v1704, %v1731
    %v1754 = vadd.f32 %v1705, %v1735
    %v1755 = vadd.f32 %v1706, %v1739
    %vm1756 = vcmp.gt.f32.partialorder %v1748, 0.0
    %vm1757 = vcmp.gt.f32.partialorder %v1749, 0.0
    %vm1758 = vcmp.gt.f32.partialorder %v1750, 0.0
    %vm1759 = vcmp.gt.f32.partialorder %v1751, 0.0
    %vm1760 = vcmp.gt.f32.partialorder %v1752, 0.0
    %vm1761 = vcmp.gt.f32.partialorder %v1753, 0.0
    %vm1762 = vcmp.gt.f32.partialorder %v1754, 0.0
    %vm1763 = vcmp.gt.f32.partialorder %v1755, 0.0
    %v1764 = vmul.f32 %v1748, 0.2
    %v1765 = vmul.f32 %v1749, 0.2
    %v1766 = vmul.f32 %v1750, 0.2
    %v1767 = vmul.f32 %v1751, 0.2
    %v1768 = vmul.f32 %v1752, 0.2
    %v1769 = vmul.f32 %v1753, 0.2
    %v1770 = vmul.f32 %v1754, 0.2
    %v1771 = vmul.f32 %v1755, 0.2
    %v1772 = vsel %vm1756, %v1748, %v1764
    %v1773 = vsel %vm1757, %v1749, %v1765
    %v1774 = vsel %vm1758, %v1750, %v1766
    %v1775 = vsel %vm1759, %v1751, %v1767
    %v1776 = vsel %vm1760, %v1752, %v1768
    %v1777 = vsel %vm1761, %v1753, %v1769
    %v1778 = vsel %vm1762, %v1754, %v1770
    %v1779 = vsel %vm1763, %v1755, %v1771
    %s1780 = smul.u32 4, 128
    %s1781 = smul.u32 %s1780, 2
    %s1782 = sshll.u32 %s1781, 4
    %1783 = dma.done %s162, %s1782
    %v1784 = vld [vmem:[#allocation5] sm:$0xff]
    %v1785 = vld [vmem:[#allocation5 + $0x8] sm:$0xff]
    %v1786 = vld [vmem:[#allocation5 + $0x10] sm:$0xff]
    %v1787 = vld [vmem:[#allocation5 + $0x18] sm:$0xff]
    %v1788 = vld [vmem:[#allocation5 + $0x20] sm:$0xff]
    %v1789 = vld [vmem:[#allocation5 + $0x28] sm:$0xff]
    %v1790 = vld [vmem:[#allocation5 + $0x30] sm:$0xff]
    %v1791 = vld [vmem:[#allocation5 + $0x38] sm:$0xff]
    %v1792 = vld [vmem:[#allocation5 + $0x40] sm:$0xff]
    %v1793 = vld [vmem:[#allocation5 + $0x48] sm:$0xff]
    %v1794 = vld [vmem:[#allocation5 + $0x50] sm:$0xff]
    %v1795 = vld [vmem:[#allocation5 + $0x58] sm:$0xff]
    %v1796 = vld [vmem:[#allocation5 + $0x60] sm:$0xff]
    %v1797 = vld [vmem:[#allocation5 + $0x68] sm:$0xff]
    %v1798 = vld [vmem:[#allocation5 + $0x70] sm:$0xff]
    %v1799 = vld [vmem:[#allocation5 + $0x78] sm:$0xff]
    %v1800 = vld [vmem:[#allocation5 + $0x80] sm:$0xff]
    %v1801 = vld [vmem:[#allocation5 + $0x88] sm:$0xff]
    %v1802 = vld [vmem:[#allocation5 + $0x90] sm:$0xff]
    %v1803 = vld [vmem:[#allocation5 + $0x98] sm:$0xff]
    %v1804 = vld [vmem:[#allocation5 + $0xa0] sm:$0xff]
    %v1805 = vld [vmem:[#allocation5 + $0xa8] sm:$0xff]
    %v1806 = vld [vmem:[#allocation5 + $0xb0] sm:$0xff]
    %v1807 = vld [vmem:[#allocation5 + $0xb8] sm:$0xff]
    %v1808 = vld [vmem:[#allocation5 + $0xc0] sm:$0xff]
    %v1809 = vld [vmem:[#allocation5 + $0xc8] sm:$0xff]
    %v1810 = vld [vmem:[#allocation5 + $0xd0] sm:$0xff]
    %v1811 = vld [vmem:[#allocation5 + $0xd8] sm:$0xff]
    %v1812 = vld [vmem:[#allocation5 + $0xe0] sm:$0xff]
    %v1813 = vld [vmem:[#allocation5 + $0xe8] sm:$0xff]
    %v1814 = vld [vmem:[#allocation5 + $0xf0] sm:$0xff]
    %v1815 = vld [vmem:[#allocation5 + $0xf8] sm:$0xff]
    %v1816 = vld [vmem:[#allocation5 + $0x100] sm:$0xff]
    %v1817 = vld [vmem:[#allocation5 + $0x108] sm:$0xff]
    %v1818 = vld [vmem:[#allocation5 + $0x110] sm:$0xff]
    %v1819 = vld [vmem:[#allocation5 + $0x118] sm:$0xff]
    %v1820 = vld [vmem:[#allocation5 + $0x120] sm:$0xff]
    %v1821 = vld [vmem:[#allocation5 + $0x128] sm:$0xff]
    %v1822 = vld [vmem:[#allocation5 + $0x130] sm:$0xff]
    %v1823 = vld [vmem:[#allocation5 + $0x138] sm:$0xff]
    %v1824 = vld [vmem:[#allocation5 + $0x140] sm:$0xff]
    %v1825 = vld [vmem:[#allocation5 + $0x148] sm:$0xff]
    %v1826 = vld [vmem:[#allocation5 + $0x150] sm:$0xff]
    %v1827 = vld [vmem:[#allocation5 + $0x158] sm:$0xff]
    %v1828 = vld [vmem:[#allocation5 + $0x160] sm:$0xff]
    %v1829 = vld [vmem:[#allocation5 + $0x168] sm:$0xff]
    %v1830 = vld [vmem:[#allocation5 + $0x170] sm:$0xff]
    %v1831 = vld [vmem:[#allocation5 + $0x178] sm:$0xff]
    %v1832 = vld [vmem:[#allocation5 + $0x180] sm:$0xff]
    %v1833 = vld [vmem:[#allocation5 + $0x188] sm:$0xff]
    %v1834 = vld [vmem:[#allocation5 + $0x190] sm:$0xff]
    %v1835 = vld [vmem:[#allocation5 + $0x198] sm:$0xff]
    %v1836 = vld [vmem:[#allocation5 + $0x1a0] sm:$0xff]
    %v1837 = vld [vmem:[#allocation5 + $0x1a8] sm:$0xff]
    %v1838 = vld [vmem:[#allocation5 + $0x1b0] sm:$0xff]
    %v1839 = vld [vmem:[#allocation5 + $0x1b8] sm:$0xff]
    %v1840 = vld [vmem:[#allocation5 + $0x1c0] sm:$0xff]
    %v1841 = vld [vmem:[#allocation5 + $0x1c8] sm:$0xff]
    %v1842 = vld [vmem:[#allocation5 + $0x1d0] sm:$0xff]
    %v1843 = vld [vmem:[#allocation5 + $0x1d8] sm:$0xff]
    %v1844 = vld [vmem:[#allocation5 + $0x1e0] sm:$0xff]
    %v1845 = vld [vmem:[#allocation5 + $0x1e8] sm:$0xff]
    %v1846 = vld [vmem:[#allocation5 + $0x1f0] sm:$0xff]
    %v1847 = vld [vmem:[#allocation5 + $0x1f8] sm:$0xff]
    %v1848 = vld [vmem:[#allocation5 + $0x200] sm:$0xff]
    %v1849 = vld [vmem:[#allocation5 + $0x208] sm:$0xff]
    %v1850 = vld [vmem:[#allocation5 + $0x210] sm:$0xff]
    %v1851 = vld [vmem:[#allocation5 + $0x218] sm:$0xff]
    %v1852 = vld [vmem:[#allocation5 + $0x220] sm:$0xff]
    %v1853 = vld [vmem:[#allocation5 + $0x228] sm:$0xff]
    %v1854 = vld [vmem:[#allocation5 + $0x230] sm:$0xff]
    %v1855 = vld [vmem:[#allocation5 + $0x238] sm:$0xff]
    %v1856 = vld [vmem:[#allocation5 + $0x240] sm:$0xff]
    %v1857 = vld [vmem:[#allocation5 + $0x248] sm:$0xff]
    %v1858 = vld [vmem:[#allocation5 + $0x250] sm:$0xff]
    %v1859 = vld [vmem:[#allocation5 + $0x258] sm:$0xff]
    %v1860 = vld [vmem:[#allocation5 + $0x260] sm:$0xff]
    %v1861 = vld [vmem:[#allocation5 + $0x268] sm:$0xff]
    %v1862 = vld [vmem:[#allocation5 + $0x270] sm:$0xff]
    %v1863 = vld [vmem:[#allocation5 + $0x278] sm:$0xff]
    %v1864 = vld [vmem:[#allocation5 + $0x280] sm:$0xff]
    %v1865 = vld [vmem:[#allocation5 + $0x288] sm:$0xff]
    %v1866 = vld [vmem:[#allocation5 + $0x290] sm:$0xff]
    %v1867 = vld [vmem:[#allocation5 + $0x298] sm:$0xff]
    %v1868 = vld [vmem:[#allocation5 + $0x2a0] sm:$0xff]
    %v1869 = vld [vmem:[#allocation5 + $0x2a8] sm:$0xff]
    %v1870 = vld [vmem:[#allocation5 + $0x2b0] sm:$0xff]
    %v1871 = vld [vmem:[#allocation5 + $0x2b8] sm:$0xff]
    %v1872 = vld [vmem:[#allocation5 + $0x2c0] sm:$0xff]
    %v1873 = vld [vmem:[#allocation5 + $0x2c8] sm:$0xff]
    %v1874 = vld [vmem:[#allocation5 + $0x2d0] sm:$0xff]
    %v1875 = vld [vmem:[#allocation5 + $0x2d8] sm:$0xff]
    %v1876 = vld [vmem:[#allocation5 + $0x2e0] sm:$0xff]
    %v1877 = vld [vmem:[#allocation5 + $0x2e8] sm:$0xff]
    %v1878 = vld [vmem:[#allocation5 + $0x2f0] sm:$0xff]
    %v1879 = vld [vmem:[#allocation5 + $0x2f8] sm:$0xff]
    %v1880 = vld [vmem:[#allocation5 + $0x300] sm:$0xff]
    %v1881 = vld [vmem:[#allocation5 + $0x308] sm:$0xff]
    %v1882 = vld [vmem:[#allocation5 + $0x310] sm:$0xff]
    %v1883 = vld [vmem:[#allocation5 + $0x318] sm:$0xff]
    %v1884 = vld [vmem:[#allocation5 + $0x320] sm:$0xff]
    %v1885 = vld [vmem:[#allocation5 + $0x328] sm:$0xff]
    %v1886 = vld [vmem:[#allocation5 + $0x330] sm:$0xff]
    %v1887 = vld [vmem:[#allocation5 + $0x338] sm:$0xff]
    %v1888 = vld [vmem:[#allocation5 + $0x340] sm:$0xff]
    %v1889 = vld [vmem:[#allocation5 + $0x348] sm:$0xff]
    %v1890 = vld [vmem:[#allocation5 + $0x350] sm:$0xff]
    %v1891 = vld [vmem:[#allocation5 + $0x358] sm:$0xff]
    %v1892 = vld [vmem:[#allocation5 + $0x360] sm:$0xff]
    %v1893 = vld [vmem:[#allocation5 + $0x368] sm:$0xff]
    %v1894 = vld [vmem:[#allocation5 + $0x370] sm:$0xff]
    %v1895 = vld [vmem:[#allocation5 + $0x378] sm:$0xff]
    %v1896 = vld [vmem:[#allocation5 + $0x380] sm:$0xff]
    %v1897 = vld [vmem:[#allocation5 + $0x388] sm:$0xff]
    %v1898 = vld [vmem:[#allocation5 + $0x390] sm:$0xff]
    %v1899 = vld [vmem:[#allocation5 + $0x398] sm:$0xff]
    %v1900 = vld [vmem:[#allocation5 + $0x3a0] sm:$0xff]
    %v1901 = vld [vmem:[#allocation5 + $0x3a8] sm:$0xff]
    %v1902 = vld [vmem:[#allocation5 + $0x3b0] sm:$0xff]
    %v1903 = vld [vmem:[#allocation5 + $0x3b8] sm:$0xff]
    %v1904 = vld [vmem:[#allocation5 + $0x3c0] sm:$0xff]
    %v1905 = vld [vmem:[#allocation5 + $0x3c8] sm:$0xff]
    %v1906 = vld [vmem:[#allocation5 + $0x3d0] sm:$0xff]
    %v1907 = vld [vmem:[#allocation5 + $0x3d8] sm:$0xff]
    %v1908 = vld [vmem:[#allocation5 + $0x3e0] sm:$0xff]
    %v1909 = vld [vmem:[#allocation5 + $0x3e8] sm:$0xff]
    %v1910 = vld [vmem:[#allocation5 + $0x3f0] sm:$0xff]
    %v1911 = vld [vmem:[#allocation5 + $0x3f8] sm:$0xff]
    %v1912 = vpack.c.bf16 %v1772, %v1772
    %v1913 = vpack.c.bf16 %v1773, %v1773
    %v1914 = vpack.c.bf16 %v1774, %v1774
    %v1915 = vpack.c.bf16 %v1775, %v1775
    %v1916 = vpack.c.bf16 %v1776, %v1776
    %v1917 = vpack.c.bf16 %v1777, %v1777
    %v1918 = vpack.c.bf16 %v1778, %v1778
    %v1919 = vpack.c.bf16 %v1779, %v1779
    %v1920 = vld [vmem:[#allocation12 + $0x1d] sm:$0x3]
    %v1922 = vlaneseq
    %v1923 = vshrl.u32 %v1922, 7
    %v1924 = vsub.s32 0, %v1923
    %v1925 = vrot.slane %v1920, %v1924
    %v1926 = vlaneseq
    %v1927 = vshrl.u32 %v1926, 7
    %v1928 = vsub.s32 1, %v1927
    %v1929 = vrot.slane %v1920, %v1928
    %1932 = vmatprep.subr.bf16.mxu0 %v1785
    %1933 = vmatpush1.bf16.msra.mxu0 %v1784
    %1934 = vmatprep.subr.bf16.mxu0 %v1787
    %1935 = vmatpush1.bf16.msra.mxu0 %v1786
    %1936 = vmatprep.subr.bf16.mxu0 %v1789
    %1937 = vmatpush1.bf16.msra.mxu0 %v1788
    %1938 = vmatprep.subr.bf16.mxu0 %v1791
    %1939 = vmatpush1.bf16.msra.mxu0 %v1790
    %1940 = vmatprep.subr.bf16.mxu0 %v1793
    %1941 = vmatpush1.bf16.msra.mxu0 %v1792
    %1942 = vmatprep.subr.bf16.mxu0 %v1795
    %1943 = vmatpush1.bf16.msra.mxu0 %v1794
    %1944 = vmatprep.subr.bf16.mxu0 %v1797
    %1945 = vmatpush1.bf16.msra.mxu0 %v1796
    %1946 = vmatprep.subr.bf16.mxu0 %v1799
    %1947 = vmatpush1.bf16.msra.mxu0 %v1798
    %1948 = vmatprep.subr.bf16.mxu0 %v1801
    %1949 = vmatpush1.bf16.msra.mxu0 %v1800
    %1950 = vmatprep.subr.bf16.mxu0 %v1803
    %1951 = vmatpush1.bf16.msra.mxu0 %v1802
    %1952 = vmatprep.subr.bf16.mxu0 %v1805
    %1953 = vmatpush1.bf16.msra.mxu0 %v1804
    %1954 = vmatprep.subr.bf16.mxu0 %v1807
    %1955 = vmatpush1.bf16.msra.mxu0 %v1806
    %1956 = vmatprep.subr.bf16.mxu0 %v1809
    %1957 = vmatpush1.bf16.msra.mxu0 %v1808
    %1958 = vmatprep.subr.bf16.mxu0 %v1811
    %1959 = vmatpush1.bf16.msra.mxu0 %v1810
    %1960 = vmatprep.subr.bf16.mxu0 %v1813
    %1961 = vmatpush1.bf16.msra.mxu0 %v1812
    %1962 = vmatprep.subr.bf16.mxu0 %v1815
    %1963 = vmatpush1.bf16.msra.mxu0 %v1814
    %1964 = vmatprep.mubr.bf16.mxu0 %v1913
    %1965 = vmatmul.mubr.bf16.gmra.mrb[0].mxu0 %v1912
    %v1966 = vpop.f32.mrb[0].mxu0
    %v1967 = vadd.f32 %v1925, %v1966
    %v1968 = vpop.f32.mrb[0].mxu0
    %v1969 = vadd.f32 %v1929, %v1968
    %v1970 = vpop.f32.mrb[0].mxu0
    %v1971 = vpop.f32.mrb[0].mxu0
    %1972 = vdwg.mxu0
    %1973 = vmatprep.subr.bf16.mxu0 %v1817
    %1974 = vmatpush1.bf16.msra.mxu0 %v1816
    %1975 = vmatprep.subr.bf16.mxu0 %v1819
    %1976 = vmatpush1.bf16.msra.mxu0 %v1818
    %1977 = vmatprep.subr.bf16.mxu0 %v1821
    %1978 = vmatpush1.bf16.msra.mxu0 %v1820
    %1979 = vmatprep.subr.bf16.mxu0 %v1823
    %1980 = vmatpush1.bf16.msra.mxu0 %v1822
    %1981 = vmatprep.subr.bf16.mxu0 %v1825
    %1982 = vmatpush1.bf16.msra.mxu0 %v1824
    %1983 = vmatprep.subr.bf16.mxu0 %v1827
    %1984 = vmatpush1.bf16.msra.mxu0 %v1826
    %1985 = vmatprep.subr.bf16.mxu0 %v1829
    %1986 = vmatpush1.bf16.msra.mxu0 %v1828
    %1987 = vmatprep.subr.bf16.mxu0 %v1831
    %1988 = vmatpush1.bf16.msra.mxu0 %v1830
    %1989 = vmatprep.subr.bf16.mxu0 %v1833
    %1990 = vmatpush1.bf16.msra.mxu0 %v1832
    %1991 = vmatprep.subr.bf16.mxu0 %v1835
    %1992 = vmatpush1.bf16.msra.mxu0 %v1834
    %1993 = vmatprep.subr.bf16.mxu0 %v1837
    %1994 = vmatpush1.bf16.msra.mxu0 %v1836
    %1995 = vmatprep.subr.bf16.mxu0 %v1839
    %1996 = vmatpush1.bf16.msra.mxu0 %v1838
    %1997 = vmatprep.subr.bf16.mxu0 %v1841
    %1998 = vmatpush1.bf16.msra.mxu0 %v1840
    %1999 = vmatprep.subr.bf16.mxu0 %v1843
    %2000 = vmatpush1.bf16.msra.mxu0 %v1842
    %2001 = vmatprep.subr.bf16.mxu0 %v1845
    %2002 = vmatpush1.bf16.msra.mxu0 %v1844
    %2003 = vmatprep.subr.bf16.mxu0 %v1847
    %2004 = vmatpush1.bf16.msra.mxu0 %v1846
    %2005 = vmatprep.mubr.bf16.mxu0 %v1915
    %2006 = vmatmul.mubr.bf16.gmra.mrb[0].mxu0 %v1914
    %v2007 = vpop.f32.mrb[0].mxu0
    %v2008 = vadd.f32 %v1967, %v2007
    %v2009 = vpop.f32.mrb[0].mxu0
    %v2010 = vadd.f32 %v1969, %v2009
    %v2011 = vpop.f32.mrb[0].mxu0
    %v2012 = vpop.f32.mrb[0].mxu0
    %2013 = vdwg.mxu0
    %2014 = vmatprep.subr.bf16.mxu0 %v1849
    %2015 = vmatpush1.bf16.msra.mxu0 %v1848
    %2016 = vmatprep.subr.bf16.mxu0 %v1851
    %2017 = vmatpush1.bf16.msra.mxu0 %v1850
    %2018 = vmatprep.subr.bf16.mxu0 %v1853
    %2019 = vmatpush1.bf16.msra.mxu0 %v1852
    %2020 = vmatprep.subr.bf16.mxu0 %v1855
    %2021 = vmatpush1.bf16.msra.mxu0 %v1854
    %2022 = vmatprep.subr.bf16.mxu0 %v1857
    %2023 = vmatpush1.bf16.msra.mxu0 %v1856
    %2024 = vmatprep.subr.bf16.mxu0 %v1859
    %2025 = vmatpush1.bf16.msra.mxu0 %v1858
    %2026 = vmatprep.subr.bf16.mxu0 %v1861
    %2027 = vmatpush1.bf16.msra.mxu0 %v1860
    %2028 = vmatprep.subr.bf16.mxu0 %v1863
    %2029 = vmatpush1.bf16.msra.mxu0 %v1862
    %2030 = vmatprep.subr.bf16.mxu0 %v1865
    %2031 = vmatpush1.bf16.msra.mxu0 %v1864
    %2032 = vmatprep.subr.bf16.mxu0 %v1867
    %2033 = vmatpush1.bf16.msra.mxu0 %v1866
    %2034 = vmatprep.subr.bf16.mxu0 %v1869
    %2035 = vmatpush1.bf16.msra.mxu0 %v1868
    %2036 = vmatprep.subr.bf16.mxu0 %v1871
    %2037 = vmatpush1.bf16.msra.mxu0 %v1870
    %2038 = vmatprep.subr.bf16.mxu0 %v1873
    %2039 = vmatpush1.bf16.msra.mxu0 %v1872
    %2040 = vmatprep.subr.bf16.mxu0 %v1875
    %2041 = vmatpush1.bf16.msra.mxu0 %v1874
    %2042 = vmatprep.subr.bf16.mxu0 %v1877
    %2043 = vmatpush1.bf16.msra.mxu0 %v1876
    %2044 = vmatprep.subr.bf16.mxu0 %v1879
    %2045 = vmatpush1.bf16.msra.mxu0 %v1878
    %2046 = vmatprep.mubr.bf16.mxu0 %v1917
    %2047 = vmatmul.mubr.bf16.gmra.mrb[0].mxu0 %v1916
    %v2048 = vpop.f32.mrb[0].mxu0
    %v2049 = vadd.f32 %v2008, %v2048
    %v2050 = vpop.f32.mrb[0].mxu0
    %v2051 = vadd.f32 %v2010, %v2050
    %v2052 = vpop.f32.mrb[0].mxu0
    %v2053 = vpop.f32.mrb[0].mxu0
    %2054 = vdwg.mxu0
    %2055 = vmatprep.subr.bf16.mxu0 %v1881
    %2056 = vmatpush1.bf16.msra.mxu0 %v1880
    %2057 = vmatprep.subr.bf16.mxu0 %v1883
    %2058 = vmatpush1.bf16.msra.mxu0 %v1882
    %2059 = vmatprep.subr.bf16.mxu0 %v1885
    %2060 = vmatpush1.bf16.msra.mxu0 %v1884
    %2061 = vmatprep.subr.bf16.mxu0 %v1887
    %2062 = vmatpush1.bf16.msra.mxu0 %v1886
    %2063 = vmatprep.subr.bf16.mxu0 %v1889
    %2064 = vmatpush1.bf16.msra.mxu0 %v1888
    %2065 = vmatprep.subr.bf16.mxu0 %v1891
    %2066 = vmatpush1.bf16.msra.mxu0 %v1890
    %2067 = vmatprep.subr.bf16.mxu0 %v1893
    %2068 = vmatpush1.bf16.msra.mxu0 %v1892
    %2069 = vmatprep.subr.bf16.mxu0 %v1895
    %2070 = vmatpush1.bf16.msra.mxu0 %v1894
    %2071 = vmatprep.subr.bf16.mxu0 %v1897
    %2072 = vmatpush1.bf16.msra.mxu0 %v1896
    %2073 = vmatprep.subr.bf16.mxu0 %v1899
    %2074 = vmatpush1.bf16.msra.mxu0 %v1898
    %2075 = vmatprep.subr.bf16.mxu0 %v1901
    %2076 = vmatpush1.bf16.msra.mxu0 %v1900
    %2077 = vmatprep.subr.bf16.mxu0 %v1903
    %2078 = vmatpush1.bf16.msra.mxu0 %v1902
    %2079 = vmatprep.subr.bf16.mxu0 %v1905
    %2080 = vmatpush1.bf16.msra.mxu0 %v1904
    %2081 = vmatprep.subr.bf16.mxu0 %v1907
    %2082 = vmatpush1.bf16.msra.mxu0 %v1906
    %2083 = vmatprep.subr.bf16.mxu0 %v1909
    %2084 = vmatpush1.bf16.msra.mxu0 %v1908
    %2085 = vmatprep.subr.bf16.mxu0 %v1911
    %2086 = vmatpush1.bf16.msra.mxu0 %v1910
    %2087 = vmatprep.mubr.bf16.mxu0 %v1919
    %2088 = vmatmul.mubr.bf16.gmra.mrb[0].mxu0 %v1918
    %v2089 = vpop.f32.mrb[0].mxu0
    %v2090 = vadd.f32 %v2049, %v2089
    %v2091 = vpop.f32.mrb[0].mxu0
    %v2092 = vadd.f32 %v2051, %v2091
    %v2093 = vpop.f32.mrb[0].mxu0
    %v2094 = vpop.f32.mrb[0].mxu0
    %2095 = vdwg.mxu0
    %v2096 = vtanh.pop %v2090
    %v2097 = vtanh.pop %v2092
    %2098 = vst [vmem:[#allocation13] sm:$0xff] %v2096
    %2099 = vst [vmem:[#allocation13 + $0x8] sm:$0xff] %v2097
    // Predicated region
    $region26: #{tpu_custom_call.1} parent=1 // pred_check
      _
    $region27: #{tpu_custom_call.1} parent=1 // pred_check_branch
      %2101 = sbr.rel (0) target = $region29
    $region28: #{tpu_custom_call.1} parent=1 // pred_region
      %s2103 = ssub.s32 256, 256
      %2104 = vsyncadd [#allocation9], %s2103
      %s2106 = sshll.u32 [#allocation13], 4
      %s2107 = int_to_ptr.vmem [resolvable:$true] %s2106
      %2109 = dma.vmem_to_hbm [thread:$0]  %s2107, 256, %s7, [#allocation9]
    $region29: #{tpu_custom_call.1} parent=1 // pred_fallthru
      _
    // Predicated region
    $region30: #{tpu_custom_call.1} parent=1 // pred_check
      _
    $region31: #{tpu_custom_call.1} parent=1 // pred_check_branch
      %2111 = sbr.rel (0) target = $region33
    $region32: #{tpu_custom_call.1} parent=1 // pred_region
      %2112 = dma.done [#allocation9], 256
    $region33: #{tpu_custom_call.1} parent=1 // pred_fallthru
      _
    %2113 = vsyncpa [#allocation8], 1
    %2114 = vsyncpa [#allocation11], 1
    %2115 = vsyncpa [#allocation9], 1
  %2116 = vsyncmov [#allocation6]
  %s2117 = vpop.sfrf %2116
  %p2118 = scmp.eq.s32.totalorder %s2117, 0
  %p2119 = pneg %p2118
  %2121 = shalt.err (%p2119)
  %s2122 = scalar_lea.sflag [#allocation6], 1
  %2123 = vsyncmov %s2122
  %s2124 = vpop.sfrf %2123
  %p2125 = scmp.eq.s32.totalorder %s2124, 0
  %p2126 = pneg %p2125
  %2128 = shalt.err (%p2126)
  %s2129 = scalar_lea.sflag [#allocation6], 2
  %2130 = vsyncmov %s2129
  %s2131 = vpop.sfrf %2130
  %p2132 = scmp.eq.s32.totalorder %s2131, 0
  %p2133 = pneg %p2132
  %2135 = shalt.err (%p2133)
  %s2136 = scalar_lea.sflag [#allocation6], 3
  %2137 = vsyncmov %s2136
  %s2138 = vpop.sfrf %2137
  %p2139 = scmp.eq.s32.totalorder %s2138, 0
  %p2140 = pneg %p2139
  %2142 = shalt.err (%p2140)

</llo_original>
